<compile_context>
chip_gen: v7x
topology: tpu7x:2x2x1
jax: 0.10.0
libtpu: 0.0.40
codegen_flags: <defaults>
</compile_context>

<pallas_src>
import jax
import jax.numpy as jnp
from jax.experimental import pallas as pl
from jax.experimental.pallas import tpu as pltpu


def vae_kernel(x_ref, eps_ref,
               w_enc_ref, b_enc_ref,
               w_mulv_ref, b_mulv_ref,
               w_dec_ref, b_dec_ref,
               recon_ref, mu_ref, logvar_ref):
    latent = mu_ref.shape[-1]

    # ---- encoder: Linear + ReLU (bf16 MXU inputs, f32 accumulate) ----------
    x = x_ref[...]                                           # bf16 (TB, D_in)
    h = jnp.dot(x, w_enc_ref[...], preferred_element_type=jnp.float32)
    h = h + b_enc_ref[...]                                   # f32 bias add
    encoded = jnp.maximum(h, 0.0)                            # f32 ReLU

    # ---- fused tomean || tologvar: one MXU matmul, slice the halves --------
    mulv = jnp.dot(encoded.astype(w_mulv_ref.dtype), w_mulv_ref[...],
                   preferred_element_type=jnp.float32)
    mulv = mulv + b_mulv_ref[...]
    mu = mulv[:, :latent]                                    # lane-aligned slice
    logvar = mulv[:, latent:]

    # ---- latent_sample (training): rsample = mu + std * eps (all f32) ------
    std = jnp.exp(logvar * 0.5)                              # EUP transcendental
    latent_z = mu + std * eps_ref[...]

    # ---- decoder: Linear ----------------------------------------------------
    recon = jnp.dot(latent_z.astype(w_dec_ref.dtype), w_dec_ref[...],
                    preferred_element_type=jnp.float32)
    recon = recon + b_dec_ref[...]

    recon_ref[...] = recon.astype(recon_ref.dtype)
    mu_ref[...] = mu.astype(mu_ref.dtype)
    logvar_ref[...] = logvar.astype(logvar_ref.dtype)


def vae_forward(x, eps, params, *, tb=128):
    """Full VAE forward pass: batch-tiled grid, weights resident in VMEM."""
    B, D_in = x.shape
    latent = params["w_mulv"].shape[0]
    assert B % tb == 0, "batch must be a multiple of the batch tile"

    # bf16 at the pallas_call boundary for MXU inputs / HBM bandwidth.
    x_bf = x.astype(jnp.bfloat16)
    w_enc = params["w_enc"].astype(jnp.bfloat16)
    w_mulv = params["w_mulv"].astype(jnp.bfloat16)
    w_dec = params["w_dec"].astype(jnp.bfloat16)

    rows = lambda i: (i, 0)     # batch-tiled operands
    fixed = lambda i: (0, 0)    # VMEM-resident weights / biases

    in_specs = [
        pl.BlockSpec((tb, D_in), rows),              # x
        pl.BlockSpec((tb, latent), rows),            # eps
        pl.BlockSpec((D_in, latent), fixed),         # w_enc
        pl.BlockSpec((1, latent), fixed),            # b_enc
        pl.BlockSpec((latent, 2 * latent), fixed),   # w_mulv (mu || logvar)
        pl.BlockSpec((1, 2 * latent), fixed),        # b_mulv
        pl.BlockSpec((latent, D_in), fixed),         # w_dec
        pl.BlockSpec((1, D_in), fixed),              # b_dec
    ]
    out_specs = (
        pl.BlockSpec((tb, D_in), rows),              # reconstruction
        pl.BlockSpec((tb, latent), rows),            # latent_mean
        pl.BlockSpec((tb, latent), rows),            # latent_logvar
    )
    out_shapes = (
        jax.ShapeDtypeStruct((B, D_in), jnp.float32),
        jax.ShapeDtypeStruct((B, latent), jnp.float32),
        jax.ShapeDtypeStruct((B, latent), jnp.float32),
    )

    recon, mu, logvar = pl.pallas_call(
        vae_kernel,
        out_shape=out_shapes,
        grid=(pl.cdiv(B, tb),),
        in_specs=in_specs,
        out_specs=out_specs,
        # "parallel" lets v7x shard the batch axis across its 2 TensorCores;
        # harmless on single-TC v5e/v6e. VMEM footprint here is far below the
        # default scoped limit, so no vmem_limit_bytes override is needed.
        compiler_params=pltpu.CompilerParams(
            dimension_semantics=("parallel",)),
    )(
        x_bf, eps,
        w_enc, params["b_enc"],
        w_mulv, params["b_mulv"],
        w_dec, params["b_dec"],
    )
    return {
        "reconstruction": recon,
        "latent_mean": mu,
        "latent_logvar": logvar,
    }


def init_params(key, in_features, latent_size):
    ks = jax.random.split(key, 8)
    scale = 0.02

    def lin(kw, kb, fan_in, fan_out):
        w = scale * jax.random.normal(kw, (fan_in, fan_out), jnp.float32)
        b = scale * jax.random.normal(kb, (1, fan_out), jnp.float32)
        return w, b

    w_enc, b_enc = lin(ks[0], ks[1], in_features, latent_size)
    w_mu, b_mu = lin(ks[2], ks[3], latent_size, latent_size)
    w_lv, b_lv = lin(ks[4], ks[5], latent_size, latent_size)
    w_dec, b_dec = lin(ks[6], ks[7], latent_size, in_features)
    # Fuse tomean / tologvar into one projection: [latent, 2*latent].
    w_mulv = jnp.concatenate([w_mu, w_lv], axis=1)
    b_mulv = jnp.concatenate([b_mu, b_lv], axis=1)
    return {
        "w_enc": w_enc, "b_enc": b_enc,
        "w_mulv": w_mulv, "b_mulv": b_mulv,
        "w_dec": w_dec, "b_dec": b_dec,
    }


def ref_forward(x, eps, params):
    """Pure-JAX reference mirroring the kernel's bf16 matmul inputs."""
    bf = lambda a: a.astype(jnp.bfloat16).astype(jnp.float32)
    latent = params["w_mulv"].shape[0]
    h = jnp.maximum(bf(x) @ bf(params["w_enc"]) + params["b_enc"], 0.0)
    mulv = bf(h) @ bf(params["w_mulv"]) + params["b_mulv"]
    mu = mulv[:, :latent]
    lv = mulv[:, latent:]
    lat = mu + jnp.exp(0.5 * lv) * eps
    rec = bf(lat) @ bf(params["w_dec"]) + params["b_dec"]
    return rec, mu, lv


if __name__ == "__main__":
    B = 256          # batch (tiled by TB=128 -> grid of 2)
    D_IN = 256       # flattened input features (lane-dense, 2*128)
    LATENT = 128     # latent_size (lane-dense)

    key = jax.random.PRNGKey(0)
    k_params, k_x, k_eps = jax.random.split(key, 3)

    params = init_params(k_params, D_IN, LATENT)
    x = jax.random.normal(k_x, (B, D_IN), jnp.float32)
    # Reparameterization noise (Normal(mu, std).rsample() draws this in torch).
    # TODO(synk): could be generated in-kernel via pltpu.prng_seed +
    # pltpu.stateful_normal to drop one input stream; kept as an explicit
    # input so the forward pass stays bit-verifiable against the reference.
    eps = jax.random.normal(k_eps, (B, LATENT), jnp.float32)

    out = jax.jit(vae_forward)(x, eps, params)
    jax.block_until_ready(out)

    rec_ref, mu_ref, lv_ref = ref_forward(x, eps, params)

    assert out["reconstruction"].shape == (B, D_IN)
    assert out["latent_mean"].shape == (B, LATENT)
    assert out["latent_logvar"].shape == (B, LATENT)
    assert jnp.allclose(out["latent_mean"], mu_ref, atol=1e-3, rtol=1e-2)
    assert jnp.allclose(out["latent_logvar"], lv_ref, atol=1e-3, rtol=1e-2)
    assert jnp.allclose(out["reconstruction"], rec_ref, atol=1e-3, rtol=1e-2)

    print("KERNEL_OK")
</pallas_src>

<mosaic_0001>
module attributes {stable_mosaic.version = 11 : i64} {
  func.func @vae_kernel(%arg0: i32, %arg1: memref<128x256xbf16, #tpu.memory_space<vmem>>, %arg2: memref<128x128xf32, #tpu.memory_space<vmem>>, %arg3: memref<256x128xbf16, #tpu.memory_space<vmem>>, %arg4: memref<1x128xf32, #tpu.memory_space<vmem>>, %arg5: memref<128x256xbf16, #tpu.memory_space<vmem>>, %arg6: memref<1x256xf32, #tpu.memory_space<vmem>>, %arg7: memref<128x256xbf16, #tpu.memory_space<vmem>>, %arg8: memref<1x256xf32, #tpu.memory_space<vmem>>, %arg9: memref<128x256xf32, #tpu.memory_space<vmem>>, %arg10: memref<128x128xf32, #tpu.memory_space<vmem>>, %arg11: memref<128x128xf32, #tpu.memory_space<vmem>>) attributes {dimension_semantics = [#tpu.dimension_semantics<parallel>], iteration_bounds = array<i64: 2>, scalar_prefetch = 0 : i64, scratch_operands = 0 : i64, tpu.core_type = #tpu.core_type<tc>, window_params = [{transform_indices = @transform_0, window_bounds = array<i64: 128, 256>}, {transform_indices = @transform_1, window_bounds = array<i64: 128, 128>}, {pipeline_mode = #tpu.pipeline_mode<synchronous>, transform_indices = @transform_2, window_bounds = array<i64: 256, 128>}, {pipeline_mode = #tpu.pipeline_mode<synchronous>, transform_indices = @transform_3, window_bounds = array<i64: 1, 128>}, {pipeline_mode = #tpu.pipeline_mode<synchronous>, transform_indices = @transform_4, window_bounds = array<i64: 128, 256>}, {pipeline_mode = #tpu.pipeline_mode<synchronous>, transform_indices = @transform_5, window_bounds = array<i64: 1, 256>}, {pipeline_mode = #tpu.pipeline_mode<synchronous>, transform_indices = @transform_6, window_bounds = array<i64: 128, 256>}, {pipeline_mode = #tpu.pipeline_mode<synchronous>, transform_indices = @transform_7, window_bounds = array<i64: 1, 256>}, {transform_indices = @transform_8, window_bounds = array<i64: 128, 256>}, {transform_indices = @transform_9, window_bounds = array<i64: 128, 128>}, {transform_indices = @transform_10, window_bounds = array<i64: 128, 128>}]} {
    %c0 = arith.constant 0 : index
    %c0_0 = arith.constant 0 : index
    %0 = vector.load %arg1[%c0, %c0_0] : memref<128x256xbf16, #tpu.memory_space<vmem>>, vector<128x256xbf16>
    %c0_1 = arith.constant 0 : index
    %c0_2 = arith.constant 0 : index
    %1 = vector.load %arg3[%c0_1, %c0_2] : memref<256x128xbf16, #tpu.memory_space<vmem>>, vector<256x128xbf16>
    %cst = arith.constant dense<0.000000e+00> : vector<128x128xf32>
    %2 = tpu.matmul %0, %1, %cst {dimension_numbers = #tpu.dot_dimension_numbers<[1], [0], [0], [1], [0, 0, 1, 1], [], []>} : vector<128x256xbf16>, vector<256x128xbf16>, vector<128x128xf32> -> vector<128x128xf32>
    %c0_3 = arith.constant 0 : index
    %c0_4 = arith.constant 0 : index
    %3 = vector.load %arg4[%c0_3, %c0_4] : memref<1x128xf32, #tpu.memory_space<vmem>>, vector<1x128xf32>
    %4 = vector.broadcast %3 : vector<1x128xf32> to vector<128x128xf32>
    %5 = arith.addf %2, %4 : vector<128x128xf32>
    %cst_5 = arith.constant 0.000000e+00 : f32
    %6 = vector.broadcast %cst_5 : f32 to vector<128x128xf32>
    %7 = arith.maximumf %5, %6 : vector<128x128xf32>
    %8 = arith.truncf %7 : vector<128x128xf32> to vector<128x128xbf16>
    %c0_6 = arith.constant 0 : index
    %c0_7 = arith.constant 0 : index
    %9 = vector.load %arg5[%c0_6, %c0_7] : memref<128x256xbf16, #tpu.memory_space<vmem>>, vector<128x256xbf16>
    %cst_8 = arith.constant dense<0.000000e+00> : vector<128x256xf32>
    %10 = tpu.matmul %8, %9, %cst_8 {dimension_numbers = #tpu.dot_dimension_numbers<[1], [0], [0], [1], [0, 0, 1, 1], [], []>} : vector<128x128xbf16>, vector<128x256xbf16>, vector<128x256xf32> -> vector<128x256xf32>
    %c0_9 = arith.constant 0 : index
    %c0_10 = arith.constant 0 : index
    %11 = vector.load %arg6[%c0_9, %c0_10] : memref<1x256xf32, #tpu.memory_space<vmem>>, vector<1x256xf32>
    %12 = vector.broadcast %11 : vector<1x256xf32> to vector<128x256xf32>
    %13 = arith.addf %10, %12 : vector<128x256xf32>
    %14 = vector.extract_strided_slice %13 {offsets = [0, 0], sizes = [128, 128], strides = [1, 1]} : vector<128x256xf32> to vector<128x128xf32>
    %15 = vector.extract_strided_slice %13 {offsets = [0, 128], sizes = [128, 128], strides = [1, 1]} : vector<128x256xf32> to vector<128x128xf32>
    %cst_11 = arith.constant 5.000000e-01 : f32
    %16 = vector.broadcast %cst_11 : f32 to vector<128x128xf32>
    %17 = arith.mulf %15, %16 : vector<128x128xf32>
    %18 = math.exp %17 : vector<128x128xf32>
    %c0_12 = arith.constant 0 : index
    %c0_13 = arith.constant 0 : index
    %19 = vector.load %arg2[%c0_12, %c0_13] : memref<128x128xf32, #tpu.memory_space<vmem>>, vector<128x128xf32>
    %20 = arith.mulf %18, %19 : vector<128x128xf32>
    %21 = arith.addf %14, %20 : vector<128x128xf32>
    %22 = arith.truncf %21 : vector<128x128xf32> to vector<128x128xbf16>
    %c0_14 = arith.constant 0 : index
    %c0_15 = arith.constant 0 : index
    %23 = vector.load %arg7[%c0_14, %c0_15] : memref<128x256xbf16, #tpu.memory_space<vmem>>, vector<128x256xbf16>
    %cst_16 = arith.constant dense<0.000000e+00> : vector<128x256xf32>
    %24 = tpu.matmul %22, %23, %cst_16 {dimension_numbers = #tpu.dot_dimension_numbers<[1], [0], [0], [1], [0, 0, 1, 1], [], []>} : vector<128x128xbf16>, vector<128x256xbf16>, vector<128x256xf32> -> vector<128x256xf32>
    %c0_17 = arith.constant 0 : index
    %c0_18 = arith.constant 0 : index
    %25 = vector.load %arg8[%c0_17, %c0_18] : memref<1x256xf32, #tpu.memory_space<vmem>>, vector<1x256xf32>
    %26 = vector.broadcast %25 : vector<1x256xf32> to vector<128x256xf32>
    %27 = arith.addf %24, %26 : vector<128x256xf32>
    %c0_19 = arith.constant 0 : index
    %c0_20 = arith.constant 0 : index
    %28 = vector.load %arg9[%c0_19, %c0_20] : memref<128x256xf32, #tpu.memory_space<vmem>>, vector<128x256xf32>
    tpu.vector_store %arg9[%c0_19, %c0_20], %27 {strides = array<i32>} : memref<128x256xf32, #tpu.memory_space<vmem>>, vector<128x256xf32>,
    %c0_21 = arith.constant 0 : index
    %c0_22 = arith.constant 0 : index
    %29 = vector.load %arg10[%c0_21, %c0_22] : memref<128x128xf32, #tpu.memory_space<vmem>>, vector<128x128xf32>
    tpu.vector_store %arg10[%c0_21, %c0_22], %14 {strides = array<i32>} : memref<128x128xf32, #tpu.memory_space<vmem>>, vector<128x128xf32>,
    %c0_23 = arith.constant 0 : index
    %c0_24 = arith.constant 0 : index
    %30 = vector.load %arg11[%c0_23, %c0_24] : memref<128x128xf32, #tpu.memory_space<vmem>>, vector<128x128xf32>
    tpu.vector_store %arg11[%c0_23, %c0_24], %15 {strides = array<i32>} : memref<128x128xf32, #tpu.memory_space<vmem>>, vector<128x128xf32>,
    return
  }
  func.func @transform_0(%arg0: i32) -> (i32, i32) {
    %c0_i32 = arith.constant 0 : i32
    %c0_i32_0 = arith.constant 0 : i32
    return %arg0, %c0_i32 : i32, i32
  }
  func.func @transform_1(%arg0: i32) -> (i32, i32) {
    %c0_i32 = arith.constant 0 : i32
    %c0_i32_0 = arith.constant 0 : i32
    return %arg0, %c0_i32 : i32, i32
  }
  func.func @transform_2(%arg0: i32) -> (i32, i32) {
    %c0_i32 = arith.constant 0 : i32
    %c0_i32_0 = arith.constant 0 : i32
    %c0_i32_1 = arith.constant 0 : i32
    return %c0_i32, %c0_i32_0 : i32, i32
  }
  func.func @transform_3(%arg0: i32) -> (i32, i32) {
    %c0_i32 = arith.constant 0 : i32
    %c0_i32_0 = arith.constant 0 : i32
    %c0_i32_1 = arith.constant 0 : i32
    return %c0_i32, %c0_i32_0 : i32, i32
  }
  func.func @transform_4(%arg0: i32) -> (i32, i32) {
    %c0_i32 = arith.constant 0 : i32
    %c0_i32_0 = arith.constant 0 : i32
    %c0_i32_1 = arith.constant 0 : i32
    return %c0_i32, %c0_i32_0 : i32, i32
  }
  func.func @transform_5(%arg0: i32) -> (i32, i32) {
    %c0_i32 = arith.constant 0 : i32
    %c0_i32_0 = arith.constant 0 : i32
    %c0_i32_1 = arith.constant 0 : i32
    return %c0_i32, %c0_i32_0 : i32, i32
  }
  func.func @transform_6(%arg0: i32) -> (i32, i32) {
    %c0_i32 = arith.constant 0 : i32
    %c0_i32_0 = arith.constant 0 : i32
    %c0_i32_1 = arith.constant 0 : i32
    return %c0_i32, %c0_i32_0 : i32, i32
  }
  func.func @transform_7(%arg0: i32) -> (i32, i32) {
    %c0_i32 = arith.constant 0 : i32
    %c0_i32_0 = arith.constant 0 : i32
    %c0_i32_1 = arith.constant 0 : i32
    return %c0_i32, %c0_i32_0 : i32, i32
  }
  func.func @transform_8(%arg0: i32) -> (i32, i32) {
    %c0_i32 = arith.constant 0 : i32
    %c0_i32_0 = arith.constant 0 : i32
    return %arg0, %c0_i32 : i32, i32
  }
  func.func @transform_9(%arg0: i32) -> (i32, i32) {
    %c0_i32 = arith.constant 0 : i32
    %c0_i32_0 = arith.constant 0 : i32
    return %arg0, %c0_i32 : i32, i32
  }
  func.func @transform_10(%arg0: i32) -> (i32, i32) {
    %c0_i32 = arith.constant 0 : i32
    %c0_i32_0 = arith.constant 0 : i32
    return %arg0, %c0_i32 : i32, i32
  }
}

</mosaic_0001>

<llo_original>
// kernel: vae_forward.1
$region0: #{vae_forward.1}
  #allocation0 [shape = 'u32[]', space=smem, size = 0x4, offset = 0x4, fixed_abs, tag = 'smem constant byte address 0x4 - core index']
  #allocation1 [shape = 'u32[144,128]{1,0:T(1,128)}', space=vmem, size = 0x12000, scoped, tag = 'internal scratch']
  %s0 = inlined_call_operand.vmem [shape: bf16[256,256], index: 0, kind: input, shape index: {}]
  %s1 = inlined_call_operand.vmem [shape: f32[256,128], index: 1, kind: input, shape index: {}]
  %s2 = inlined_call_operand.vmem [shape: bf16[256,128], index: 2, kind: input, shape index: {}]
  %s3 = inlined_call_operand.vmem [shape: f32[1,128], index: 3, kind: input, shape index: {}]
  %s4 = inlined_call_operand.vmem [shape: bf16[128,256], index: 4, kind: input, shape index: {}]
  %s5 = inlined_call_operand.vmem [shape: f32[1,256], index: 5, kind: input, shape index: {}]
  %s6 = inlined_call_operand.vmem [shape: bf16[128,256], index: 6, kind: input, shape index: {}]
  %s7 = inlined_call_operand.vmem [shape: f32[1,256], index: 7, kind: input, shape index: {}]
  %s8 = inlined_call_operand.hbm [shape: f32[256,256], index: 8, kind: output, shape index: {0}]
  %s9 = inlined_call_operand.hbm [shape: f32[256,128], index: 9, kind: output, shape index: {1}]
  %s10 = inlined_call_operand.hbm [shape: f32[256,128], index: 10, kind: output, shape index: {2}]
  %11 = xla_tuple %s8, %s9, %s10
  %s12 = sld [smem:[#allocation0]]
  $region81: #{vae_forward.1} parent=0
    _
  %s14 = ssub.s32 1, %s12
  %s15 = scalar_select 0, %s14, %s12
  $region1: #{vae_forward.1} parent=0
    #allocation2 [shape = 'u8[262144]{0}', space=vmem, size = 0x40000, scoped, tag = 'output window, operand 0']
    #allocation3 [shape = 's32[2]{0}', space=sflag, size = 0x8, scoped, tag = 'scoped memory for vae_forward.1']
    #allocation4 [shape = 'u8[131072]{0}', space=vmem, size = 0x20000, scoped, tag = 'output window, operand 1']
    #allocation5 [shape = 's32[2]{0}', space=sflag, size = 0x8, scoped, tag = 'scoped memory for vae_forward.1']
    #allocation6 [shape = 'u8[131072]{0}', space=vmem, size = 0x20000, scoped, tag = 'output window, operand 2']
    %16 = vsyncpa [#allocation3], 0
    %s17 = scalar_lea.sflag [#allocation3], 1
    %18 = vsyncpa %s17, 0
    %19 = vsyncpa [#allocation5], 0
    %s20 = scalar_lea.sflag [#allocation5], 1
    %21 = vsyncpa %s20, 0
    loop: start=0, step=1, limit=4
    $region2: #{vae_forward.1} parent=1 // loop_pre_header
      _
    $region3: #{vae_forward.1} parent=1 // loop_header
      %s23 = sphi 0, %s27
      %p24 = scmp.ge.s32.totalorder %s23, 4
      %s33 = sphi 0, %s35
      %s36 = sphi 0, %s33
      %s37 = sphi 0, %s36
      %s53 = sphi 0, %s37
      %s59 = sphi 0, %s61
      %s62 = sphi 0, %s59
      %s63 = sphi 0, %s62
      %s79 = sphi 0, %s63
      %s83 = sphi 0, %s83
      %s85 = sphi 0, %s83
      %s86 = sphi 0, %s85
      %s100 = sphi 0, %s86
      %s104 = sphi 0, %s104
      %s106 = sphi 0, %s104
      %s107 = sphi 0, %s106
      %s121 = sphi 0, %s107
      %s125 = sphi 0, %s125
      %s127 = sphi 0, %s125
      %s128 = sphi 0, %s127
      %s142 = sphi 0, %s128
      %s146 = sphi 0, %s146
      %s148 = sphi 0, %s146
      %s149 = sphi 0, %s148
      %s163 = sphi 0, %s149
      %s167 = sphi 0, %s167
      %s169 = sphi 0, %s167
      %s170 = sphi 0, %s169
      %s184 = sphi 0, %s170
      %s188 = sphi 0, %s188
      %s190 = sphi 0, %s188
      %s191 = sphi 0, %s190
      %s205 = sphi 0, %s191
      %s211 = sphi 0, %s213
      %s214 = sphi 0, %s211
      %s215 = sphi 0, %s214
      %s231 = sphi 0, %s215
      %s237 = sphi 0, %s239
      %s240 = sphi 0, %s237
      %s241 = sphi 0, %s240
      %s257 = sphi 0, %s241
      %s263 = sphi 0, %s265
      %s266 = sphi 0, %s263
      %s267 = sphi 0, %s266
      %s283 = sphi 0, %s267
    $region4: #{vae_forward.1} parent=1 // loop_header_branch
      %26 = sbr.rel (%p24) target = $region8
    $region5: #{vae_forward.1} parent=1 // loop_body
      %s28 = ssub.s32 %s23, 1
      %s29 = ssub.s32 %s23, 2
      %s30 = sadd.s32 %s23, 1
      %s31 = ssub.s32 %s23, %s30
      %p32 = scmp.eq.s32.totalorder %s31, 0
      %s34 = sadd.s32 %s33, 1
      %s35 = scalar_select %p32, %s33, %s34
      %p38 = pneg %p32
      %p39 = scmp.eq.s32.totalorder %s23, 1
      %p40 = por %p38, %p39
      %p41 = scmp.ne.s32.totalorder %s33, %s36
      %p42 = scmp.eq.s32.totalorder %s23, 0
      %p43 = por %p41, %p42
      %p44 = scmp.ne.s32.totalorder %s33, %s36
      %p45 = scmp.eq.s32.totalorder %s28, 1
      %p46 = por %p44, %p45
      %p47 = scmp.ne.s32.totalorder %s36, %s37
      %p48 = scmp.eq.s32.totalorder %s28, 0
      %p49 = por %p47, %p48
      %p50 = scmp.ne.s32.totalorder %s36, %s37
      %p51 = scmp.eq.s32.totalorder %s29, 1
      %p52 = por %p50, %p51
      %p54 = scmp.ne.s32.totalorder %s37, %s53
      %p55 = scmp.eq.s32.totalorder %s29, 0
      %p56 = por %p54, %p55
      %s57 = ssub.s32 %s23, %s30
      %p58 = scmp.eq.s32.totalorder %s57, 0
      %s60 = sadd.s32 %s59, 1
      %s61 = scalar_select %p58, %s59, %s60
      %p64 = pneg %p58
      %p65 = scmp.eq.s32.totalorder %s23, 1
      %p66 = por %p64, %p65
      %p67 = scmp.ne.s32.totalorder %s59, %s62
      %p68 = scmp.eq.s32.totalorder %s23, 0
      %p69 = por %p67, %p68
      %p70 = scmp.ne.s32.totalorder %s59, %s62
      %p71 = scmp.eq.s32.totalorder %s28, 1
      %p72 = por %p70, %p71
      %p73 = scmp.ne.s32.totalorder %s62, %s63
      %p74 = scmp.eq.s32.totalorder %s28, 0
      %p75 = por %p73, %p74
      %p76 = scmp.ne.s32.totalorder %s62, %s63
      %p77 = scmp.eq.s32.totalorder %s29, 1
      %p78 = por %p76, %p77
      %p80 = scmp.ne.s32.totalorder %s63, %s79
      %p81 = scmp.eq.s32.totalorder %s29, 0
      %p82 = por %p80, %p81
      %s84 = sadd.s32 %s83, 1
      %p87 = scmp.eq.s32.totalorder %s23, 1
      %p88 = scmp.ne.s32.totalorder %s83, %s85
      %p89 = scmp.eq.s32.totalorder %s23, 0
      %p90 = por %p88, %p89
      %p91 = scmp.ne.s32.totalorder %s83, %s85
      %p92 = scmp.eq.s32.totalorder %s28, 1
      %p93 = por %p91, %p92
      %p94 = scmp.ne.s32.totalorder %s85, %s86
      %p95 = scmp.eq.s32.totalorder %s28, 0
      %p96 = por %p94, %p95
      %p97 = scmp.ne.s32.totalorder %s85, %s86
      %p98 = scmp.eq.s32.totalorder %s29, 1
      %p99 = por %p97, %p98
      %p101 = scmp.ne.s32.totalorder %s86, %s100
      %p102 = scmp.eq.s32.totalorder %s29, 0
      %p103 = por %p101, %p102
      %s105 = sadd.s32 %s104, 1
      %p108 = scmp.eq.s32.totalorder %s23, 1
      %p109 = scmp.ne.s32.totalorder %s104, %s106
      %p110 = scmp.eq.s32.totalorder %s23, 0
      %p111 = por %p109, %p110
      %p112 = scmp.ne.s32.totalorder %s104, %s106
      %p113 = scmp.eq.s32.totalorder %s28, 1
      %p114 = por %p112, %p113
      %p115 = scmp.ne.s32.totalorder %s106, %s107
      %p116 = scmp.eq.s32.totalorder %s28, 0
      %p117 = por %p115, %p116
      %p118 = scmp.ne.s32.totalorder %s106, %s107
      %p119 = scmp.eq.s32.totalorder %s29, 1
      %p120 = por %p118, %p119
      %p122 = scmp.ne.s32.totalorder %s107, %s121
      %p123 = scmp.eq.s32.totalorder %s29, 0
      %p124 = por %p122, %p123
      %s126 = sadd.s32 %s125, 1
      %p129 = scmp.eq.s32.totalorder %s23, 1
      %p130 = scmp.ne.s32.totalorder %s125, %s127
      %p131 = scmp.eq.s32.totalorder %s23, 0
      %p132 = por %p130, %p131
      %p133 = scmp.ne.s32.totalorder %s125, %s127
      %p134 = scmp.eq.s32.totalorder %s28, 1
      %p135 = por %p133, %p134
      %p136 = scmp.ne.s32.totalorder %s127, %s128
      %p137 = scmp.eq.s32.totalorder %s28, 0
      %p138 = por %p136, %p137
      %p139 = scmp.ne.s32.totalorder %s127, %s128
      %p140 = scmp.eq.s32.totalorder %s29, 1
      %p141 = por %p139, %p140
      %p143 = scmp.ne.s32.totalorder %s128, %s142
      %p144 = scmp.eq.s32.totalorder %s29, 0
      %p145 = por %p143, %p144
      %s147 = sadd.s32 %s146, 1
      %p150 = scmp.eq.s32.totalorder %s23, 1
      %p151 = scmp.ne.s32.totalorder %s146, %s148
      %p152 = scmp.eq.s32.totalorder %s23, 0
      %p153 = por %p151, %p152
      %p154 = scmp.ne.s32.totalorder %s146, %s148
      %p155 = scmp.eq.s32.totalorder %s28, 1
      %p156 = por %p154, %p155
      %p157 = scmp.ne.s32.totalorder %s148, %s149
      %p158 = scmp.eq.s32.totalorder %s28, 0
      %p159 = por %p157, %p158
      %p160 = scmp.ne.s32.totalorder %s148, %s149
      %p161 = scmp.eq.s32.totalorder %s29, 1
      %p162 = por %p160, %p161
      %p164 = scmp.ne.s32.totalorder %s149, %s163
      %p165 = scmp.eq.s32.totalorder %s29, 0
      %p166 = por %p164, %p165
      %s168 = sadd.s32 %s167, 1
      %p171 = scmp.eq.s32.totalorder %s23, 1
      %p172 = scmp.ne.s32.totalorder %s167, %s169
      %p173 = scmp.eq.s32.totalorder %s23, 0
      %p174 = por %p172, %p173
      %p175 = scmp.ne.s32.totalorder %s167, %s169
      %p176 = scmp.eq.s32.totalorder %s28, 1
      %p177 = por %p175, %p176
      %p178 = scmp.ne.s32.totalorder %s169, %s170
      %p179 = scmp.eq.s32.totalorder %s28, 0
      %p180 = por %p178, %p179
      %p181 = scmp.ne.s32.totalorder %s169, %s170
      %p182 = scmp.eq.s32.totalorder %s29, 1
      %p183 = por %p181, %p182
      %p185 = scmp.ne.s32.totalorder %s170, %s184
      %p186 = scmp.eq.s32.totalorder %s29, 0
      %p187 = por %p185, %p186
      %s189 = sadd.s32 %s188, 1
      %p192 = scmp.eq.s32.totalorder %s23, 1
      %p193 = scmp.ne.s32.totalorder %s188, %s190
      %p194 = scmp.eq.s32.totalorder %s23, 0
      %p195 = por %p193, %p194
      %p196 = scmp.ne.s32.totalorder %s188, %s190
      %p197 = scmp.eq.s32.totalorder %s28, 1
      %p198 = por %p196, %p197
      %p199 = scmp.ne.s32.totalorder %s190, %s191
      %p200 = scmp.eq.s32.totalorder %s28, 0
      %p201 = por %p199, %p200
      %p202 = scmp.ne.s32.totalorder %s190, %s191
      %p203 = scmp.eq.s32.totalorder %s29, 1
      %p204 = por %p202, %p203
      %p206 = scmp.ne.s32.totalorder %s191, %s205
      %p207 = scmp.eq.s32.totalorder %s29, 0
      %p208 = por %p206, %p207
      %s209 = ssub.s32 %s23, %s30
      %p210 = scmp.eq.s32.totalorder %s209, 0
      %s212 = sadd.s32 %s211, 1
      %s213 = scalar_select %p210, %s211, %s212
      %p216 = pneg %p210
      %p217 = scmp.eq.s32.totalorder %s23, 1
      %p218 = por %p216, %p217
      %p219 = scmp.ne.s32.totalorder %s211, %s214
      %p220 = scmp.eq.s32.totalorder %s23, 0
      %p221 = por %p219, %p220
      %p222 = scmp.ne.s32.totalorder %s211, %s214
      %p223 = scmp.eq.s32.totalorder %s28, 1
      %p224 = por %p222, %p223
      %p225 = scmp.ne.s32.totalorder %s214, %s215
      %p226 = scmp.eq.s32.totalorder %s28, 0
      %p227 = por %p225, %p226
      %p228 = scmp.ne.s32.totalorder %s214, %s215
      %p229 = scmp.eq.s32.totalorder %s29, 1
      %p230 = por %p228, %p229
      %p232 = scmp.ne.s32.totalorder %s215, %s231
      %p233 = scmp.eq.s32.totalorder %s29, 0
      %p234 = por %p232, %p233
      %s235 = ssub.s32 %s23, %s30
      %p236 = scmp.eq.s32.totalorder %s235, 0
      %s238 = sadd.s32 %s237, 1
      %s239 = scalar_select %p236, %s237, %s238
      %p242 = pneg %p236
      %p243 = scmp.eq.s32.totalorder %s23, 1
      %p244 = por %p242, %p243
      %p245 = scmp.ne.s32.totalorder %s237, %s240
      %p246 = scmp.eq.s32.totalorder %s23, 0
      %p247 = por %p245, %p246
      %p248 = scmp.ne.s32.totalorder %s237, %s240
      %p249 = scmp.eq.s32.totalorder %s28, 1
      %p250 = por %p248, %p249
      %p251 = scmp.ne.s32.totalorder %s240, %s241
      %p252 = scmp.eq.s32.totalorder %s28, 0
      %p253 = por %p251, %p252
      %p254 = scmp.ne.s32.totalorder %s240, %s241
      %p255 = scmp.eq.s32.totalorder %s29, 1
      %p256 = por %p254, %p255
      %p258 = scmp.ne.s32.totalorder %s241, %s257
      %p259 = scmp.eq.s32.totalorder %s29, 0
      %p260 = por %p258, %p259
      %s261 = ssub.s32 %s23, %s30
      %p262 = scmp.eq.s32.totalorder %s261, 0
      %s264 = sadd.s32 %s263, 1
      %s265 = scalar_select %p262, %s263, %s264
      %p268 = pneg %p262
      %p269 = scmp.eq.s32.totalorder %s23, 1
      %p270 = por %p268, %p269
      %p271 = scmp.ne.s32.totalorder %s263, %s266
      %p272 = scmp.eq.s32.totalorder %s23, 0
      %p273 = por %p271, %p272
      %p274 = scmp.ne.s32.totalorder %s263, %s266
      %p275 = scmp.eq.s32.totalorder %s28, 1
      %p276 = por %p274, %p275
      %p277 = scmp.ne.s32.totalorder %s266, %s267
      %p278 = scmp.eq.s32.totalorder %s28, 0
      %p279 = por %p277, %p278
      %p280 = scmp.ne.s32.totalorder %s266, %s267
      %p281 = scmp.eq.s32.totalorder %s29, 1
      %p282 = por %p280, %p281
      %p284 = scmp.ne.s32.totalorder %s267, %s283
      %p285 = scmp.eq.s32.totalorder %s29, 0
      %p286 = por %p284, %p285
      %p287 = scmp.le.s32.totalorder 1, %s23
      %p288 = scmp.lt.s32.totalorder %s23, 3
      %p289 = pnand %p287, %p288
      %p290 = pneg %p289
      // Predicated region
      $region9: #{vae_forward.1} parent=5 // pred_check
        _
      $region10: #{vae_forward.1} parent=5 // pred_check_branch
        %292 = sbr.rel (%p289) target = $region12
      $region11: #{vae_forward.1} parent=5 // pred_region
        %s293 = ssub.s32 %s23, 1
        // Predicated region
        $region13: #{vae_forward.1} parent=11 // pred_check
          %p294 = pneg %p96
        $region14: #{vae_forward.1} parent=11 // pred_check_branch
          %296 = sbr.rel (%p294) target = $region16
        $region15: #{vae_forward.1} parent=11 // pred_region
          _
        $region16: #{vae_forward.1} parent=11 // pred_fallthru
          _
        // Predicated region
        $region17: #{vae_forward.1} parent=11 // pred_check
          %p297 = pneg %p117
        $region18: #{vae_forward.1} parent=11 // pred_check_branch
          %299 = sbr.rel (%p297) target = $region20
        $region19: #{vae_forward.1} parent=11 // pred_region
          _
        $region20: #{vae_forward.1} parent=11 // pred_fallthru
          _
        // Predicated region
        $region21: #{vae_forward.1} parent=11 // pred_check
          %p300 = pneg %p138
        $region22: #{vae_forward.1} parent=11 // pred_check_branch
          %302 = sbr.rel (%p300) target = $region24
        $region23: #{vae_forward.1} parent=11 // pred_region
          _
        $region24: #{vae_forward.1} parent=11 // pred_fallthru
          _
        // Predicated region
        $region25: #{vae_forward.1} parent=11 // pred_check
          %p303 = pneg %p159
        $region26: #{vae_forward.1} parent=11 // pred_check_branch
          %305 = sbr.rel (%p303) target = $region28
        $region27: #{vae_forward.1} parent=11 // pred_region
          _
        $region28: #{vae_forward.1} parent=11 // pred_fallthru
          _
        // Predicated region
        $region29: #{vae_forward.1} parent=11 // pred_check
          %p306 = pneg %p180
        $region30: #{vae_forward.1} parent=11 // pred_check_branch
          %308 = sbr.rel (%p306) target = $region32
        $region31: #{vae_forward.1} parent=11 // pred_region
          _
        $region32: #{vae_forward.1} parent=11 // pred_fallthru
          _
        // Predicated region
        $region33: #{vae_forward.1} parent=11 // pred_check
          %p309 = pneg %p201
        $region34: #{vae_forward.1} parent=11 // pred_check_branch
          %311 = sbr.rel (%p309) target = $region36
        $region35: #{vae_forward.1} parent=11 // pred_region
          _
        $region36: #{vae_forward.1} parent=11 // pred_fallthru
          _
      $region12: #{vae_forward.1} parent=5 // pred_fallthru
        _
      %p312 = scmp.lt.s32.totalorder %s23, 2
      // Predicated region
      $region37: #{vae_forward.1} parent=5 // pred_check
        %p313 = pneg %p312
      $region38: #{vae_forward.1} parent=5 // pred_check_branch
        %315 = sbr.rel (%p313) target = $region40
      $region39: #{vae_forward.1} parent=5 // pred_region
        // Predicated region
        $region41: #{vae_forward.1} parent=39 // pred_check
          %p316 = pneg %p43
        $region42: #{vae_forward.1} parent=39 // pred_check_branch
          %318 = sbr.rel (%p316) target = $region44
        $region43: #{vae_forward.1} parent=39 // pred_region
          %s319 = smul.u32 16, %s23
          %p320 = scmp.lt.s32.totalorder %s319, 31
          %s321 = scalar_select %p320, %s319, 31
          %s322 = smul.addr %s321, 2
          %s323 = smul.addr %s322, 4
          %s324 = scalar_lea.vmem %s0, %s323
          %s325 = smul.u32 16, %s23
        $region44: #{vae_forward.1} parent=39 // pred_fallthru
          _
        // Predicated region
        $region45: #{vae_forward.1} parent=39 // pred_check
          %p326 = pneg %p69
        $region46: #{vae_forward.1} parent=39 // pred_check_branch
          %328 = sbr.rel (%p326) target = $region48
        $region47: #{vae_forward.1} parent=39 // pred_region
          %s329 = smul.u32 16, %s23
          %p330 = scmp.lt.s32.totalorder %s329, 31
          %s331 = scalar_select %p330, %s329, 31
          %s332 = smul.addr %s331, 8
          %s333 = scalar_lea.vmem %s1, %s332
          %s334 = smul.u32 16, %s23
        $region48: #{vae_forward.1} parent=39 // pred_fallthru
          _
      $region40: #{vae_forward.1} parent=5 // pred_fallthru
        _
      %p335 = scmp.le.s32.totalorder 1, %s23
      %p336 = scmp.lt.s32.totalorder %s23, 3
      %p337 = pnand %p335, %p336
      %p338 = pneg %p337
      // Predicated region
      $region49: #{vae_forward.1} parent=5 // pred_check
        _
      $region50: #{vae_forward.1} parent=5 // pred_check_branch
        %340 = sbr.rel (%p337) target = $region52
      $region51: #{vae_forward.1} parent=5 // pred_region
        %s341 = ssub.s32 %s23, 1
        %s342 = smul.u32 16, %s28
        %p343 = scmp.lt.s32.totalorder %s342, 31
        %s344 = scalar_select %p343, %s342, 31
        %s345 = smul.addr %s344, 2
        %s346 = smul.addr %s345, 4
        %s347 = scalar_lea.vmem %s0, %s346
        %p348 = pneg %p49
        %p349 = pneg %p46
        %s350 = smul.u32 16, %s28
        %p351 = scmp.lt.s32.totalorder %s350, 31
        %s352 = scalar_select %p351, %s350, 31
        %s353 = smul.addr %s352, 8
        %s354 = scalar_lea.vmem %s1, %s353
        %p355 = pneg %p75
        %p356 = pneg %p72
        %p357 = pneg %p96
        %p358 = pneg %p93
        %p359 = pneg %p117
        %p360 = pneg %p114
        %p361 = pneg %p138
        %p362 = pneg %p135
        %p363 = pneg %p159
        %p364 = pneg %p156
        %p365 = pneg %p180
        %p366 = pneg %p177
        %p367 = pneg %p201
        %p368 = pneg %p198
        %p369 = pneg %p227
        %p370 = pneg %p224
        %s371 = sand.u32 %s214, 1
        %s372 = scalar_lea.sflag [#allocation3], %s371
        %s373 = sand.u32 %s214, 1
        %s374 = smul.addr %s373, 256
        %s375 = scalar_lea.vmem [#allocation2], %s374
        %p376 = pneg %p253
        %p377 = pneg %p250
        %s378 = sand.u32 %s28, 1
        %s379 = scalar_lea.sflag [#allocation5], %s378
        %s380 = sand.u32 %s240, 1
        %s381 = smul.addr %s380, 128
        %s382 = scalar_lea.vmem [#allocation4], %s381
        %p383 = pneg %p279
        %p384 = pneg %p276
        %s385 = sand.u32 %s28, 1
        %s386 = scalar_lea.sflag [#allocation5], %s385
        %s387 = sand.u32 %s266, 1
        %s388 = smul.addr %s387, 128
        %s389 = scalar_lea.vmem [#allocation6], %s388
        %s390 = smul.u32 16, %s28
        %p391 = scmp.lt.s32.totalorder %s390, 31
        %s392 = scalar_select %p391, %s390, 31
        %s393 = smul.addr %s392, 2
        %s394 = smul.addr %s393, 4
        %s395 = scalar_lea.vmem %s0, %s394
        %s396 = smul.u32 16, %s28
        %s397 = smul.u32 16, %s28
        %p398 = scmp.lt.s32.totalorder %s397, 31
        %s399 = scalar_select %p398, %s397, 31
        %s400 = smul.addr %s399, 8
        %s401 = scalar_lea.vmem %s1, %s400
        %s402 = smul.u32 16, %s28
        %s403 = smul.u32 16, %s28
        %s404 = smul.u32 16, %s28
        %s405 = smul.u32 16, %s28
        %v407 = vld [vmem:[%s395] sm:$0xff]
        %v408 = vld [vmem:[%s395 + $0x8] sm:$0xff]
        %v409 = vld [vmem:[%s395 + $0x10] sm:$0xff]
        %v410 = vld [vmem:[%s395 + $0x18] sm:$0xff]
        %v411 = vld [vmem:[%s395 + $0x20] sm:$0xff]
        %v412 = vld [vmem:[%s395 + $0x28] sm:$0xff]
        %v413 = vld [vmem:[%s395 + $0x30] sm:$0xff]
        %v414 = vld [vmem:[%s395 + $0x38] sm:$0xff]
        %v415 = vld [vmem:[%s395 + $0x40] sm:$0xff]
        %v416 = vld [vmem:[%s395 + $0x48] sm:$0xff]
        %v417 = vld [vmem:[%s395 + $0x50] sm:$0xff]
        %v418 = vld [vmem:[%s395 + $0x58] sm:$0xff]
        %v419 = vld [vmem:[%s395 + $0x60] sm:$0xff]
        %v420 = vld [vmem:[%s395 + $0x68] sm:$0xff]
        %v421 = vld [vmem:[%s395 + $0x70] sm:$0xff]
        %v422 = vld [vmem:[%s395 + $0x78] sm:$0xff]
        %v423 = vld [vmem:[%s2] sm:$0xf]
        %v424 = vld [vmem:[%s2 + $0x4] sm:$0xf]
        %v425 = vld [vmem:[%s2 + $0x8] sm:$0xf]
        %v426 = vld [vmem:[%s2 + $0xc] sm:$0xf]
        %v427 = vld [vmem:[%s2 + $0x10] sm:$0xf]
        %v428 = vld [vmem:[%s2 + $0x14] sm:$0xf]
        %v429 = vld [vmem:[%s2 + $0x18] sm:$0xf]
        %v430 = vld [vmem:[%s2 + $0x1c] sm:$0xf]
        %v431 = vld [vmem:[%s2 + $0x20] sm:$0xf]
        %v432 = vld [vmem:[%s2 + $0x24] sm:$0xf]
        %v433 = vld [vmem:[%s2 + $0x28] sm:$0xf]
        %v434 = vld [vmem:[%s2 + $0x2c] sm:$0xf]
        %v435 = vld [vmem:[%s2 + $0x30] sm:$0xf]
        %v436 = vld [vmem:[%s2 + $0x34] sm:$0xf]
        %v437 = vld [vmem:[%s2 + $0x38] sm:$0xf]
        %v438 = vld [vmem:[%s2 + $0x3c] sm:$0xf]
        %v439 = vld [vmem:[%s2 + $0x40] sm:$0xf]
        %v440 = vld [vmem:[%s2 + $0x44] sm:$0xf]
        %v441 = vld [vmem:[%s2 + $0x48] sm:$0xf]
        %v442 = vld [vmem:[%s2 + $0x4c] sm:$0xf]
        %v443 = vld [vmem:[%s2 + $0x50] sm:$0xf]
        %v444 = vld [vmem:[%s2 + $0x54] sm:$0xf]
        %v445 = vld [vmem:[%s2 + $0x58] sm:$0xf]
        %v446 = vld [vmem:[%s2 + $0x5c] sm:$0xf]
        %v447 = vld [vmem:[%s2 + $0x60] sm:$0xf]
        %v448 = vld [vmem:[%s2 + $0x64] sm:$0xf]
        %v449 = vld [vmem:[%s2 + $0x68] sm:$0xf]
        %v450 = vld [vmem:[%s2 + $0x6c] sm:$0xf]
        %v451 = vld [vmem:[%s2 + $0x70] sm:$0xf]
        %v452 = vld [vmem:[%s2 + $0x74] sm:$0xf]
        %v453 = vld [vmem:[%s2 + $0x78] sm:$0xf]
        %v454 = vld [vmem:[%s2 + $0x7c] sm:$0xf]
        %v455 = vld [vmem:[%s3] sm:$0x1]
        %v457 = vlaneseq
        %v458 = vshrl.u32 %v457, 7
        %v459 = vsub.s32 0, %v458
        %v460 = vrot.slane %v455, %v459
        %v478 = vunpack.c.l.b16 %v407
        %v479 = vunpack.c.h.b16 %v407
        %v480 = vunpack.c.l.b16 %v408
        %v481 = vunpack.c.h.b16 %v408
        %v482 = vunpack.c.l.b16 %v409
        %v483 = vunpack.c.h.b16 %v409
        %v484 = vunpack.c.l.b16 %v410
        %v485 = vunpack.c.h.b16 %v410
        %v486 = vunpack.c.l.b16 %v411
        %v487 = vunpack.c.h.b16 %v411
        %v488 = vunpack.c.l.b16 %v412
        %v489 = vunpack.c.h.b16 %v412
        %v490 = vunpack.c.l.b16 %v413
        %v491 = vunpack.c.h.b16 %v413
        %v492 = vunpack.c.l.b16 %v414
        %v493 = vunpack.c.h.b16 %v414
        %v494 = vunpack.c.l.b16 %v415
        %v495 = vunpack.c.h.b16 %v415
        %v496 = vunpack.c.l.b16 %v416
        %v497 = vunpack.c.h.b16 %v416
        %v498 = vunpack.c.l.b16 %v417
        %v499 = vunpack.c.h.b16 %v417
        %v500 = vunpack.c.l.b16 %v418
        %v501 = vunpack.c.h.b16 %v418
        %v502 = vunpack.c.l.b16 %v419
        %v503 = vunpack.c.h.b16 %v419
        %v504 = vunpack.c.l.b16 %v420
        %v505 = vunpack.c.h.b16 %v420
        %v506 = vunpack.c.l.b16 %v421
        %v507 = vunpack.c.h.b16 %v421
        %v508 = vunpack.c.l.b16 %v422
        %v509 = vunpack.c.h.b16 %v422
        %v510 = vpack.c.b16 %v480, %v478
        %v511 = vpack.c.b16 %v481, %v479
        %v512 = vpack.c.b16 %v484, %v482
        %v513 = vpack.c.b16 %v485, %v483
        %v514 = vpack.c.b16 %v488, %v486
        %v515 = vpack.c.b16 %v489, %v487
        %v516 = vpack.c.b16 %v492, %v490
        %v517 = vpack.c.b16 %v493, %v491
        %v518 = vpack.c.b16 %v496, %v494
        %v519 = vpack.c.b16 %v497, %v495
        %v520 = vpack.c.b16 %v500, %v498
        %v521 = vpack.c.b16 %v501, %v499
        %v522 = vpack.c.b16 %v504, %v502
        %v523 = vpack.c.b16 %v505, %v503
        %v524 = vpack.c.b16 %v508, %v506
        %v525 = vpack.c.b16 %v509, %v507
        %v574 = vunpack.c.l.b16 %v423
        %v575 = vunpack.c.l.b16 %v424
        %v576 = vunpack.c.l.b16 %v425
        %v577 = vunpack.c.l.b16 %v426
        %v578 = vunpack.c.l.b16 %v427
        %v579 = vunpack.c.l.b16 %v428
        %v580 = vunpack.c.l.b16 %v429
        %v581 = vunpack.c.l.b16 %v430
        %v582 = vunpack.c.l.b16 %v431
        %v583 = vunpack.c.l.b16 %v432
        %v584 = vunpack.c.l.b16 %v433
        %v585 = vunpack.c.l.b16 %v434
        %v586 = vunpack.c.l.b16 %v435
        %v587 = vunpack.c.l.b16 %v436
        %v588 = vunpack.c.l.b16 %v437
        %v589 = vunpack.c.l.b16 %v438
        %v590 = vunpack.c.l.b16 %v439
        %v591 = vunpack.c.l.b16 %v440
        %v592 = vunpack.c.l.b16 %v441
        %v593 = vunpack.c.l.b16 %v442
        %v594 = vunpack.c.l.b16 %v443
        %v595 = vunpack.c.l.b16 %v444
        %v596 = vunpack.c.l.b16 %v445
        %v597 = vunpack.c.l.b16 %v446
        %v598 = vunpack.c.l.b16 %v447
        %v599 = vunpack.c.l.b16 %v448
        %v600 = vunpack.c.l.b16 %v449
        %v601 = vunpack.c.l.b16 %v450
        %v602 = vunpack.c.l.b16 %v451
        %v603 = vunpack.c.l.b16 %v452
        %v604 = vunpack.c.l.b16 %v453
        %v605 = vunpack.c.l.b16 %v454
        %v606 = vpack.c.b16 %v575, %v574
        %v607 = vpack.c.b16 %v577, %v576
        %v608 = vpack.c.b16 %v579, %v578
        %v609 = vpack.c.b16 %v581, %v580
        %v610 = vpack.c.b16 %v583, %v582
        %v611 = vpack.c.b16 %v585, %v584
        %v612 = vpack.c.b16 %v587, %v586
        %v613 = vpack.c.b16 %v589, %v588
        %v614 = vpack.c.b16 %v591, %v590
        %v615 = vpack.c.b16 %v593, %v592
        %v616 = vpack.c.b16 %v595, %v594
        %v617 = vpack.c.b16 %v597, %v596
        %v618 = vpack.c.b16 %v599, %v598
        %v619 = vpack.c.b16 %v601, %v600
        %v620 = vpack.c.b16 %v603, %v602
        %v621 = vpack.c.b16 %v605, %v604
        %638 = vmatprep.subr.bf16.mxu0 0
        %639 = vmatpush1.bf16.msra.mxu0 %v606
        %640 = vmatprep.subr.bf16.mxu0 0
        %641 = vmatpush1.bf16.msra.mxu0 %v607
        %642 = vmatprep.subr.bf16.mxu0 0
        %643 = vmatpush1.bf16.msra.mxu0 %v608
        %644 = vmatprep.subr.bf16.mxu0 0
        %645 = vmatpush1.bf16.msra.mxu0 %v609
        %646 = vmatprep.subr.bf16.mxu0 0
        %647 = vmatpush1.bf16.msra.mxu0 %v610
        %648 = vmatprep.subr.bf16.mxu0 0
        %649 = vmatpush1.bf16.msra.mxu0 %v611
        %650 = vmatprep.subr.bf16.mxu0 0
        %651 = vmatpush1.bf16.msra.mxu0 %v612
        %652 = vmatprep.subr.bf16.mxu0 0
        %653 = vmatpush1.bf16.msra.mxu0 %v613
        %654 = vmatprep.subr.bf16.mxu0 0
        %655 = vmatpush1.bf16.msra.mxu0 %v614
        %656 = vmatprep.subr.bf16.mxu0 0
        %657 = vmatpush1.bf16.msra.mxu0 %v615
        %658 = vmatprep.subr.bf16.mxu0 0
        %659 = vmatpush1.bf16.msra.mxu0 %v616
        %660 = vmatprep.subr.bf16.mxu0 0
        %661 = vmatpush1.bf16.msra.mxu0 %v617
        %662 = vmatprep.subr.bf16.mxu0 0
        %663 = vmatpush1.bf16.msra.mxu0 %v618
        %664 = vmatprep.subr.bf16.mxu0 0
        %665 = vmatpush1.bf16.msra.mxu0 %v619
        %666 = vmatprep.subr.bf16.mxu0 0
        %667 = vmatpush1.bf16.msra.mxu0 %v620
        %668 = vmatprep.subr.bf16.mxu0 0
        %669 = vmatpush1.bf16.msra.mxu0 %v621
        %670 = vmatprep.mubr.bf16.mxu0 %v511
        %671 = vmatmul.mubr.bf16.gmra.mrb[0].mxu0 %v510
        %v672 = vpop.f32.mrb[0].mxu0
        %v673 = vadd.f32 %v460, %v672
        %v674 = vpop.f32.mrb[0].mxu0
        %v675 = vpop.f32.mrb[0].mxu0
        %v676 = vadd.f32 %v460, %v675
        %v677 = vpop.f32.mrb[0].mxu0
        %678 = vmatprep.mubr.bf16.mxu0 %v513
        %679 = vmatmul.mubr.bf16.gmra.mrb[0].mxu0 %v512
        %v680 = vpop.f32.mrb[0].mxu0
        %v681 = vadd.f32 %v460, %v680
        %v682 = vpop.f32.mrb[0].mxu0
        %v683 = vpop.f32.mrb[0].mxu0
        %v684 = vadd.f32 %v460, %v683
        %v685 = vpop.f32.mrb[0].mxu0
        %686 = vmatprep.mubr.bf16.mxu0 %v515
        %687 = vmatmul.mubr.bf16.gmra.mrb[0].mxu0 %v514
        %v688 = vpop.f32.mrb[0].mxu0
        %v689 = vadd.f32 %v460, %v688
        %v690 = vpop.f32.mrb[0].mxu0
        %v691 = vpop.f32.mrb[0].mxu0
        %v692 = vadd.f32 %v460, %v691
        %v693 = vpop.f32.mrb[0].mxu0
        %694 = vmatprep.mubr.bf16.mxu0 %v517
        %695 = vmatmul.mubr.bf16.gmra.mrb[0].mxu0 %v516
        %v696 = vpop.f32.mrb[0].mxu0
        %v697 = vadd.f32 %v460, %v696
        %v698 = vpop.f32.mrb[0].mxu0
        %v699 = vpop.f32.mrb[0].mxu0
        %v700 = vadd.f32 %v460, %v699
        %v701 = vpop.f32.mrb[0].mxu0
        %702 = vmatprep.mubr.bf16.mxu0 %v519
        %703 = vmatmul.mubr.bf16.gmra.mrb[0].mxu0 %v518
        %v704 = vpop.f32.mrb[0].mxu0
        %v705 = vadd.f32 %v460, %v704
        %v706 = vpop.f32.mrb[0].mxu0
        %v707 = vpop.f32.mrb[0].mxu0
        %v708 = vadd.f32 %v460, %v707
        %v709 = vpop.f32.mrb[0].mxu0
        %710 = vmatprep.mubr.bf16.mxu0 %v521
        %711 = vmatmul.mubr.bf16.gmra.mrb[0].mxu0 %v520
        %v712 = vpop.f32.mrb[0].mxu0
        %v713 = vadd.f32 %v460, %v712
        %v714 = vpop.f32.mrb[0].mxu0
        %v715 = vpop.f32.mrb[0].mxu0
        %v716 = vadd.f32 %v460, %v715
        %v717 = vpop.f32.mrb[0].mxu0
        %718 = vmatprep.mubr.bf16.mxu0 %v523
        %719 = vmatmul.mubr.bf16.gmra.mrb[0].mxu0 %v522
        %v720 = vpop.f32.mrb[0].mxu0
        %v721 = vadd.f32 %v460, %v720
        %v722 = vpop.f32.mrb[0].mxu0
        %v723 = vpop.f32.mrb[0].mxu0
        %v724 = vadd.f32 %v460, %v723
        %v725 = vpop.f32.mrb[0].mxu0
        %726 = vmatprep.mubr.bf16.mxu0 %v525
        %727 = vmatmul.mubr.bf16.gmra.mrb[0].mxu0 %v524
        %v728 = vpop.f32.mrb[0].mxu0
        %v729 = vadd.f32 %v460, %v728
        %v730 = vpop.f32.mrb[0].mxu0
        %v731 = vpop.f32.mrb[0].mxu0
        %v732 = vadd.f32 %v460, %v731
        %v733 = vpop.f32.mrb[0].mxu0
        %734 = vdwg.mxu0
        %v735 = vmax.f32 %v673, 0.0
        %v736 = vmax.f32 %v676, 0.0
        %v737 = vmax.f32 %v681, 0.0
        %v738 = vmax.f32 %v684, 0.0
        %v739 = vmax.f32 %v689, 0.0
        %v740 = vmax.f32 %v692, 0.0
        %v741 = vmax.f32 %v697, 0.0
        %v742 = vmax.f32 %v700, 0.0
        %v743 = vmax.f32 %v705, 0.0
        %v744 = vmax.f32 %v708, 0.0
        %v745 = vmax.f32 %v713, 0.0
        %v746 = vmax.f32 %v716, 0.0
        %v747 = vmax.f32 %v721, 0.0
        %v748 = vmax.f32 %v724, 0.0
        %v749 = vmax.f32 %v729, 0.0
        %v750 = vmax.f32 %v732, 0.0
        %v751 = vpack.c.bf16 %v736, %v735
        %v752 = vpack.c.bf16 %v738, %v737
        %v753 = vpack.c.bf16 %v740, %v739
        %v754 = vpack.c.bf16 %v742, %v741
        %v755 = vpack.c.bf16 %v744, %v743
        %v756 = vpack.c.bf16 %v746, %v745
        %v757 = vpack.c.bf16 %v748, %v747
        %v758 = vpack.c.bf16 %v750, %v749
        %v759 = vld [vmem:[%s4] sm:$0xff]
        %v760 = vld [vmem:[%s4 + $0x8] sm:$0xff]
        %v761 = vld [vmem:[%s4 + $0x10] sm:$0xff]
        %v762 = vld [vmem:[%s4 + $0x18] sm:$0xff]
        %v763 = vld [vmem:[%s4 + $0x20] sm:$0xff]
        %v764 = vld [vmem:[%s4 + $0x28] sm:$0xff]
        %v765 = vld [vmem:[%s4 + $0x30] sm:$0xff]
        %v766 = vld [vmem:[%s4 + $0x38] sm:$0xff]
        %v767 = vld [vmem:[%s4 + $0x40] sm:$0xff]
        %v768 = vld [vmem:[%s4 + $0x48] sm:$0xff]
        %v769 = vld [vmem:[%s4 + $0x50] sm:$0xff]
        %v770 = vld [vmem:[%s4 + $0x58] sm:$0xff]
        %v771 = vld [vmem:[%s4 + $0x60] sm:$0xff]
        %v772 = vld [vmem:[%s4 + $0x68] sm:$0xff]
        %v773 = vld [vmem:[%s4 + $0x70] sm:$0xff]
        %v774 = vld [vmem:[%s4 + $0x78] sm:$0xff]
        %v775 = vld [vmem:[%s5] sm:$0x3]
        %v777 = vlaneseq
        %v778 = vshrl.u32 %v777, 7
        %v779 = vsub.s32 0, %v778
        %v780 = vrot.slane %v775, %v779
        %v781 = vlaneseq
        %v782 = vshrl.u32 %v781, 7
        %v783 = vsub.s32 1, %v782
        %v784 = vrot.slane %v775, %v783
        %v803 = vunpack.c.l.b16 %v759
        %v804 = vunpack.c.h.b16 %v759
        %v805 = vunpack.c.l.b16 %v760
        %v806 = vunpack.c.h.b16 %v760
        %v807 = vunpack.c.l.b16 %v761
        %v808 = vunpack.c.h.b16 %v761
        %v809 = vunpack.c.l.b16 %v762
        %v810 = vunpack.c.h.b16 %v762
        %v811 = vunpack.c.l.b16 %v763
        %v812 = vunpack.c.h.b16 %v763
        %v813 = vunpack.c.l.b16 %v764
        %v814 = vunpack.c.h.b16 %v764
        %v815 = vunpack.c.l.b16 %v765
        %v816 = vunpack.c.h.b16 %v765
        %v817 = vunpack.c.l.b16 %v766
        %v818 = vunpack.c.h.b16 %v766
        %v819 = vunpack.c.l.b16 %v767
        %v820 = vunpack.c.h.b16 %v767
        %v821 = vunpack.c.l.b16 %v768
        %v822 = vunpack.c.h.b16 %v768
        %v823 = vunpack.c.l.b16 %v769
        %v824 = vunpack.c.h.b16 %v769
        %v825 = vunpack.c.l.b16 %v770
        %v826 = vunpack.c.h.b16 %v770
        %v827 = vunpack.c.l.b16 %v771
        %v828 = vunpack.c.h.b16 %v771
        %v829 = vunpack.c.l.b16 %v772
        %v830 = vunpack.c.h.b16 %v772
        %v831 = vunpack.c.l.b16 %v773
        %v832 = vunpack.c.h.b16 %v773
        %v833 = vunpack.c.l.b16 %v774
        %v834 = vunpack.c.h.b16 %v774
        %v835 = vpack.c.b16 %v805, %v803
        %v836 = vpack.c.b16 %v806, %v804
        %v837 = vpack.c.b16 %v809, %v807
        %v838 = vpack.c.b16 %v810, %v808
        %v839 = vpack.c.b16 %v813, %v811
        %v840 = vpack.c.b16 %v814, %v812
        %v841 = vpack.c.b16 %v817, %v815
        %v842 = vpack.c.b16 %v818, %v816
        %v843 = vpack.c.b16 %v821, %v819
        %v844 = vpack.c.b16 %v822, %v820
        %v845 = vpack.c.b16 %v825, %v823
        %v846 = vpack.c.b16 %v826, %v824
        %v847 = vpack.c.b16 %v829, %v827
        %v848 = vpack.c.b16 %v830, %v828
        %v849 = vpack.c.b16 %v833, %v831
        %v850 = vpack.c.b16 %v834, %v832
        %867 = vmatprep.subr.bf16.mxu0 %v836
        %868 = vmatpush1.bf16.msra.mxu0 %v835
        %869 = vmatprep.subr.bf16.mxu0 %v838
        %870 = vmatpush1.bf16.msra.mxu0 %v837
        %871 = vmatprep.subr.bf16.mxu0 %v840
        %872 = vmatpush1.bf16.msra.mxu0 %v839
        %873 = vmatprep.subr.bf16.mxu0 %v842
        %874 = vmatpush1.bf16.msra.mxu0 %v841
        %875 = vmatprep.subr.bf16.mxu0 %v844
        %876 = vmatpush1.bf16.msra.mxu0 %v843
        %877 = vmatprep.subr.bf16.mxu0 %v846
        %878 = vmatpush1.bf16.msra.mxu0 %v845
        %879 = vmatprep.subr.bf16.mxu0 %v848
        %880 = vmatpush1.bf16.msra.mxu0 %v847
        %881 = vmatprep.subr.bf16.mxu0 %v850
        %882 = vmatpush1.bf16.msra.mxu0 %v849
        %883 = vmatprep.subr.bf16.mxu0 0
        %884 = vmatpush1.bf16.msra.mxu0 0
        %885 = vmatprep.subr.bf16.mxu0 0
        %886 = vmatpush1.bf16.msra.mxu0 0
        %887 = vmatprep.subr.bf16.mxu0 0
        %888 = vmatpush1.bf16.msra.mxu0 0
        %889 = vmatprep.subr.bf16.mxu0 0
        %890 = vmatpush1.bf16.msra.mxu0 0
        %891 = vmatprep.subr.bf16.mxu0 0
        %892 = vmatpush1.bf16.msra.mxu0 0
        %893 = vmatprep.subr.bf16.mxu0 0
        %894 = vmatpush1.bf16.msra.mxu0 0
        %895 = vmatprep.subr.bf16.mxu0 0
        %896 = vmatpush1.bf16.msra.mxu0 0
        %897 = vmatprep.subr.bf16.mxu0 0
        %898 = vmatpush1.bf16.msra.mxu0 0
        %899 = vmatprep.mubr.bf16.mxu0 0
        %900 = vmatmul.mubr.bf16.gmra.mrb[0].mxu0 %v751
        %v901 = vpop.f32.mrb[0].mxu0
        %v902 = vadd.f32 %v780, %v901
        %v903 = vpop.f32.mrb[0].mxu0
        %v904 = vadd.f32 %v784, %v903
        %v905 = vpop.f32.mrb[0].mxu0
        %v906 = vadd.f32 %v780, %v905
        %v907 = vpop.f32.mrb[0].mxu0
        %v908 = vadd.f32 %v784, %v907
        %909 = vmatprep.mubr.bf16.mxu0 0
        %910 = vmatmul.mubr.bf16.gmra.mrb[0].mxu0 %v752
        %v911 = vpop.f32.mrb[0].mxu0
        %v912 = vadd.f32 %v780, %v911
        %v913 = vpop.f32.mrb[0].mxu0
        %v914 = vadd.f32 %v784, %v913
        %v915 = vpop.f32.mrb[0].mxu0
        %v916 = vadd.f32 %v780, %v915
        %v917 = vpop.f32.mrb[0].mxu0
        %v918 = vadd.f32 %v784, %v917
        %919 = vmatprep.mubr.bf16.mxu0 0
        %920 = vmatmul.mubr.bf16.gmra.mrb[0].mxu0 %v753
        %v921 = vpop.f32.mrb[0].mxu0
        %v922 = vadd.f32 %v780, %v921
        %v923 = vpop.f32.mrb[0].mxu0
        %v924 = vadd.f32 %v784, %v923
        %v925 = vpop.f32.mrb[0].mxu0
        %v926 = vadd.f32 %v780, %v925
        %v927 = vpop.f32.mrb[0].mxu0
        %v928 = vadd.f32 %v784, %v927
        %929 = vmatprep.mubr.bf16.mxu0 0
        %930 = vmatmul.mubr.bf16.gmra.mrb[0].mxu0 %v754
        %v931 = vpop.f32.mrb[0].mxu0
        %v932 = vadd.f32 %v780, %v931
        %v933 = vpop.f32.mrb[0].mxu0
        %v934 = vadd.f32 %v784, %v933
        %v935 = vpop.f32.mrb[0].mxu0
        %v936 = vadd.f32 %v780, %v935
        %v937 = vpop.f32.mrb[0].mxu0
        %v938 = vadd.f32 %v784, %v937
        %939 = vmatprep.mubr.bf16.mxu0 0
        %940 = vmatmul.mubr.bf16.gmra.mrb[0].mxu0 %v755
        %v941 = vpop.f32.mrb[0].mxu0
        %v942 = vadd.f32 %v780, %v941
        %v943 = vpop.f32.mrb[0].mxu0
        %v944 = vadd.f32 %v784, %v943
        %v945 = vpop.f32.mrb[0].mxu0
        %v946 = vadd.f32 %v780, %v945
        %v947 = vpop.f32.mrb[0].mxu0
        %v948 = vadd.f32 %v784, %v947
        %949 = vmatprep.mubr.bf16.mxu0 0
        %950 = vmatmul.mubr.bf16.gmra.mrb[0].mxu0 %v756
        %v951 = vpop.f32.mrb[0].mxu0
        %v952 = vadd.f32 %v780, %v951
        %v953 = vpop.f32.mrb[0].mxu0
        %v954 = vadd.f32 %v784, %v953
        %v955 = vpop.f32.mrb[0].mxu0
        %v956 = vadd.f32 %v780, %v955
        %v957 = vpop.f32.mrb[0].mxu0
        %v958 = vadd.f32 %v784, %v957
        %959 = vmatprep.mubr.bf16.mxu0 0
        %960 = vmatmul.mubr.bf16.gmra.mrb[0].mxu0 %v757
        %v961 = vpop.f32.mrb[0].mxu0
        %v962 = vadd.f32 %v780, %v961
        %v963 = vpop.f32.mrb[0].mxu0
        %v964 = vadd.f32 %v784, %v963
        %v965 = vpop.f32.mrb[0].mxu0
        %v966 = vadd.f32 %v780, %v965
        %v967 = vpop.f32.mrb[0].mxu0
        %v968 = vadd.f32 %v784, %v967
        %969 = vmatprep.mubr.bf16.mxu0 0
        %970 = vmatmul.mubr.bf16.gmra.mrb[0].mxu0 %v758
        %v971 = vpop.f32.mrb[0].mxu0
        %v972 = vadd.f32 %v780, %v971
        %v973 = vpop.f32.mrb[0].mxu0
        %v974 = vadd.f32 %v784, %v973
        %v975 = vpop.f32.mrb[0].mxu0
        %v976 = vadd.f32 %v780, %v975
        %v977 = vpop.f32.mrb[0].mxu0
        %v978 = vadd.f32 %v784, %v977
        %979 = vdwg.mxu0
        %v980 = vmul.f32 %v904, 0.5
        %v981 = vmul.f32 %v908, 0.5
        %v982 = vmul.f32 %v914, 0.5
        %v983 = vmul.f32 %v918, 0.5
        %v984 = vmul.f32 %v924, 0.5
        %v985 = vmul.f32 %v928, 0.5
        %v986 = vmul.f32 %v934, 0.5
        %v987 = vmul.f32 %v938, 0.5
        %v988 = vmul.f32 %v944, 0.5
        %v989 = vmul.f32 %v948, 0.5
        %v990 = vmul.f32 %v954, 0.5
        %v991 = vmul.f32 %v958, 0.5
        %v992 = vmul.f32 %v964, 0.5
        %v993 = vmul.f32 %v968, 0.5
        %v994 = vmul.f32 %v974, 0.5
        %v995 = vmul.f32 %v978, 0.5
        %v996 = vmul.f32 %v980, 1.442695
        %v997 = vpow.pop %v996
        %v998 = vmul.f32 %v981, 1.442695
        %v999 = vpow.pop %v998
        %v1000 = vmul.f32 %v982, 1.442695
        %v1001 = vpow.pop %v1000
        %v1002 = vmul.f32 %v983, 1.442695
        %v1003 = vpow.pop %v1002
        %v1004 = vmul.f32 %v984, 1.442695
        %v1005 = vpow.pop %v1004
        %v1006 = vmul.f32 %v985, 1.442695
        %v1007 = vpow.pop %v1006
        %v1008 = vmul.f32 %v986, 1.442695
        %v1009 = vpow.pop %v1008
        %v1010 = vmul.f32 %v987, 1.442695
        %v1011 = vpow.pop %v1010
        %v1012 = vmul.f32 %v988, 1.442695
        %v1013 = vpow.pop %v1012
        %v1014 = vmul.f32 %v989, 1.442695
        %v1015 = vpow.pop %v1014
        %v1016 = vmul.f32 %v990, 1.442695
        %v1017 = vpow.pop %v1016
        %v1018 = vmul.f32 %v991, 1.442695
        %v1019 = vpow.pop %v1018
        %v1020 = vmul.f32 %v992, 1.442695
        %v1021 = vpow.pop %v1020
        %v1022 = vmul.f32 %v993, 1.442695
        %v1023 = vpow.pop %v1022
        %v1024 = vmul.f32 %v994, 1.442695
        %v1025 = vpow.pop %v1024
        %v1026 = vmul.f32 %v995, 1.442695
        %v1027 = vpow.pop %v1026
        %v1028 = vld [vmem:[%s401] sm:$0xff]
        %v1029 = vld [vmem:[%s401 + $0x8] sm:$0xff]
        %v1030 = vld [vmem:[%s401 + $0x10] sm:$0xff]
        %v1031 = vld [vmem:[%s401 + $0x18] sm:$0xff]
        %v1032 = vld [vmem:[%s401 + $0x20] sm:$0xff]
        %v1033 = vld [vmem:[%s401 + $0x28] sm:$0xff]
        %v1034 = vld [vmem:[%s401 + $0x30] sm:$0xff]
        %v1035 = vld [vmem:[%s401 + $0x38] sm:$0xff]
        %v1036 = vld [vmem:[%s401 + $0x40] sm:$0xff]
        %v1037 = vld [vmem:[%s401 + $0x48] sm:$0xff]
        %v1038 = vld [vmem:[%s401 + $0x50] sm:$0xff]
        %v1039 = vld [vmem:[%s401 + $0x58] sm:$0xff]
        %v1040 = vld [vmem:[%s401 + $0x60] sm:$0xff]
        %v1041 = vld [vmem:[%s401 + $0x68] sm:$0xff]
        %v1042 = vld [vmem:[%s401 + $0x70] sm:$0xff]
        %v1043 = vld [vmem:[%s401 + $0x78] sm:$0xff]
        %v1044 = vmul.f32 %v997, %v1028
        %v1045 = vmul.f32 %v999, %v1029
        %v1046 = vmul.f32 %v1001, %v1030
        %v1047 = vmul.f32 %v1003, %v1031
        %v1048 = vmul.f32 %v1005, %v1032
        %v1049 = vmul.f32 %v1007, %v1033
        %v1050 = vmul.f32 %v1009, %v1034
        %v1051 = vmul.f32 %v1011, %v1035
        %v1052 = vmul.f32 %v1013, %v1036
        %v1053 = vmul.f32 %v1015, %v1037
        %v1054 = vmul.f32 %v1017, %v1038
        %v1055 = vmul.f32 %v1019, %v1039
        %v1056 = vmul.f32 %v1021, %v1040
        %v1057 = vmul.f32 %v1023, %v1041
        %v1058 = vmul.f32 %v1025, %v1042
        %v1059 = vmul.f32 %v1027, %v1043
        %v1060 = vadd.f32 %v902, %v1044
        %v1061 = vadd.f32 %v906, %v1045
        %v1062 = vadd.f32 %v912, %v1046
        %v1063 = vadd.f32 %v916, %v1047
        %v1064 = vadd.f32 %v922, %v1048
        %v1065 = vadd.f32 %v926, %v1049
        %v1066 = vadd.f32 %v932, %v1050
        %v1067 = vadd.f32 %v936, %v1051
        %v1068 = vadd.f32 %v942, %v1052
        %v1069 = vadd.f32 %v946, %v1053
        %v1070 = vadd.f32 %v952, %v1054
        %v1071 = vadd.f32 %v956, %v1055
        %v1072 = vadd.f32 %v962, %v1056
        %v1073 = vadd.f32 %v966, %v1057
        %v1074 = vadd.f32 %v972, %v1058
        %v1075 = vadd.f32 %v976, %v1059
        %v1076 = vpack.c.bf16 %v1061, %v1060
        %v1077 = vpack.c.bf16 %v1063, %v1062
        %v1078 = vpack.c.bf16 %v1065, %v1064
        %v1079 = vpack.c.bf16 %v1067, %v1066
        %v1080 = vpack.c.bf16 %v1069, %v1068
        %v1081 = vpack.c.bf16 %v1071, %v1070
        %v1082 = vpack.c.bf16 %v1073, %v1072
        %v1083 = vpack.c.bf16 %v1075, %v1074
        %v1084 = vld [vmem:[%s6] sm:$0xff]
        %v1085 = vld [vmem:[%s6 + $0x8] sm:$0xff]
        %v1086 = vld [vmem:[%s6 + $0x10] sm:$0xff]
        %v1087 = vld [vmem:[%s6 + $0x18] sm:$0xff]
        %v1088 = vld [vmem:[%s6 + $0x20] sm:$0xff]
        %v1089 = vld [vmem:[%s6 + $0x28] sm:$0xff]
        %v1090 = vld [vmem:[%s6 + $0x30] sm:$0xff]
        %v1091 = vld [vmem:[%s6 + $0x38] sm:$0xff]
        %v1092 = vld [vmem:[%s6 + $0x40] sm:$0xff]
        %v1093 = vld [vmem:[%s6 + $0x48] sm:$0xff]
        %v1094 = vld [vmem:[%s6 + $0x50] sm:$0xff]
        %v1095 = vld [vmem:[%s6 + $0x58] sm:$0xff]
        %v1096 = vld [vmem:[%s6 + $0x60] sm:$0xff]
        %v1097 = vld [vmem:[%s6 + $0x68] sm:$0xff]
        %v1098 = vld [vmem:[%s6 + $0x70] sm:$0xff]
        %v1099 = vld [vmem:[%s6 + $0x78] sm:$0xff]
        %v1100 = vld [vmem:[%s7] sm:$0x3]
        %v1102 = vlaneseq
        %v1103 = vshrl.u32 %v1102, 7
        %v1104 = vsub.s32 0, %v1103
        %v1105 = vrot.slane %v1100, %v1104
        %v1106 = vlaneseq
        %v1107 = vshrl.u32 %v1106, 7
        %v1108 = vsub.s32 1, %v1107
        %v1109 = vrot.slane %v1100, %v1108
        %v1128 = vunpack.c.l.b16 %v1084
        %v1129 = vunpack.c.h.b16 %v1084
        %v1130 = vunpack.c.l.b16 %v1085
        %v1131 = vunpack.c.h.b16 %v1085
        %v1132 = vunpack.c.l.b16 %v1086
        %v1133 = vunpack.c.h.b16 %v1086
        %v1134 = vunpack.c.l.b16 %v1087
        %v1135 = vunpack.c.h.b16 %v1087
        %v1136 = vunpack.c.l.b16 %v1088
        %v1137 = vunpack.c.h.b16 %v1088
        %v1138 = vunpack.c.l.b16 %v1089
        %v1139 = vunpack.c.h.b16 %v1089
        %v1140 = vunpack.c.l.b16 %v1090
        %v1141 = vunpack.c.h.b16 %v1090
        %v1142 = vunpack.c.l.b16 %v1091
        %v1143 = vunpack.c.h.b16 %v1091
        %v1144 = vunpack.c.l.b16 %v1092
        %v1145 = vunpack.c.h.b16 %v1092
        %v1146 = vunpack.c.l.b16 %v1093
        %v1147 = vunpack.c.h.b16 %v1093
        %v1148 = vunpack.c.l.b16 %v1094
        %v1149 = vunpack.c.h.b16 %v1094
        %v1150 = vunpack.c.l.b16 %v1095
        %v1151 = vunpack.c.h.b16 %v1095
        %v1152 = vunpack.c.l.b16 %v1096
        %v1153 = vunpack.c.h.b16 %v1096
        %v1154 = vunpack.c.l.b16 %v1097
        %v1155 = vunpack.c.h.b16 %v1097
        %v1156 = vunpack.c.l.b16 %v1098
        %v1157 = vunpack.c.h.b16 %v1098
        %v1158 = vunpack.c.l.b16 %v1099
        %v1159 = vunpack.c.h.b16 %v1099
        %v1160 = vpack.c.b16 %v1130, %v1128
        %v1161 = vpack.c.b16 %v1131, %v1129
        %v1162 = vpack.c.b16 %v1134, %v1132
        %v1163 = vpack.c.b16 %v1135, %v1133
        %v1164 = vpack.c.b16 %v1138, %v1136
        %v1165 = vpack.c.b16 %v1139, %v1137
        %v1166 = vpack.c.b16 %v1142, %v1140
        %v1167 = vpack.c.b16 %v1143, %v1141
        %v1168 = vpack.c.b16 %v1146, %v1144
        %v1169 = vpack.c.b16 %v1147, %v1145
        %v1170 = vpack.c.b16 %v1150, %v1148
        %v1171 = vpack.c.b16 %v1151, %v1149
        %v1172 = vpack.c.b16 %v1154, %v1152
        %v1173 = vpack.c.b16 %v1155, %v1153
        %v1174 = vpack.c.b16 %v1158, %v1156
        %v1175 = vpack.c.b16 %v1159, %v1157
        %1192 = vmatprep.subr.bf16.mxu0 %v1161
        %1193 = vmatpush1.bf16.msra.mxu0 %v1160
        %1194 = vmatprep.subr.bf16.mxu0 %v1163
        %1195 = vmatpush1.bf16.msra.mxu0 %v1162
        %1196 = vmatprep.subr.bf16.mxu0 %v1165
        %1197 = vmatpush1.bf16.msra.mxu0 %v1164
        %1198 = vmatprep.subr.bf16.mxu0 %v1167
        %1199 = vmatpush1.bf16.msra.mxu0 %v1166
        %1200 = vmatprep.subr.bf16.mxu0 %v1169
        %1201 = vmatpush1.bf16.msra.mxu0 %v1168
        %1202 = vmatprep.subr.bf16.mxu0 %v1171
        %1203 = vmatpush1.bf16.msra.mxu0 %v1170
        %1204 = vmatprep.subr.bf16.mxu0 %v1173
        %1205 = vmatpush1.bf16.msra.mxu0 %v1172
        %1206 = vmatprep.subr.bf16.mxu0 %v1175
        %1207 = vmatpush1.bf16.msra.mxu0 %v1174
        %1208 = vmatprep.subr.bf16.mxu0 0
        %1209 = vmatpush1.bf16.msra.mxu0 0
        %1210 = vmatprep.subr.bf16.mxu0 0
        %1211 = vmatpush1.bf16.msra.mxu0 0
        %1212 = vmatprep.subr.bf16.mxu0 0
        %1213 = vmatpush1.bf16.msra.mxu0 0
        %1214 = vmatprep.subr.bf16.mxu0 0
        %1215 = vmatpush1.bf16.msra.mxu0 0
        %1216 = vmatprep.subr.bf16.mxu0 0
        %1217 = vmatpush1.bf16.msra.mxu0 0
        %1218 = vmatprep.subr.bf16.mxu0 0
        %1219 = vmatpush1.bf16.msra.mxu0 0
        %1220 = vmatprep.subr.bf16.mxu0 0
        %1221 = vmatpush1.bf16.msra.mxu0 0
        %1222 = vmatprep.subr.bf16.mxu0 0
        %1223 = vmatpush1.bf16.msra.mxu0 0
        %1224 = vmatprep.mubr.bf16.mxu0 0
        %1225 = vmatmul.mubr.bf16.gmra.mrb[0].mxu0 %v1076
        %v1226 = vpop.f32.mrb[0].mxu0
        %v1227 = vadd.f32 %v1105, %v1226
        %v1228 = vpop.f32.mrb[0].mxu0
        %v1229 = vadd.f32 %v1109, %v1228
        %v1230 = vpop.f32.mrb[0].mxu0
        %v1231 = vadd.f32 %v1105, %v1230
        %v1232 = vpop.f32.mrb[0].mxu0
        %v1233 = vadd.f32 %v1109, %v1232
        %1234 = vmatprep.mubr.bf16.mxu0 0
        %1235 = vmatmul.mubr.bf16.gmra.mrb[0].mxu0 %v1077
        %v1236 = vpop.f32.mrb[0].mxu0
        %v1237 = vadd.f32 %v1105, %v1236
        %v1238 = vpop.f32.mrb[0].mxu0
        %v1239 = vadd.f32 %v1109, %v1238
        %v1240 = vpop.f32.mrb[0].mxu0
        %v1241 = vadd.f32 %v1105, %v1240
        %v1242 = vpop.f32.mrb[0].mxu0
        %v1243 = vadd.f32 %v1109, %v1242
        %1244 = vmatprep.mubr.bf16.mxu0 0
        %1245 = vmatmul.mubr.bf16.gmra.mrb[0].mxu0 %v1078
        %v1246 = vpop.f32.mrb[0].mxu0
        %v1247 = vadd.f32 %v1105, %v1246
        %v1248 = vpop.f32.mrb[0].mxu0
        %v1249 = vadd.f32 %v1109, %v1248
        %v1250 = vpop.f32.mrb[0].mxu0
        %v1251 = vadd.f32 %v1105, %v1250
        %v1252 = vpop.f32.mrb[0].mxu0
        %v1253 = vadd.f32 %v1109, %v1252
        %1254 = vmatprep.mubr.bf16.mxu0 0
        %1255 = vmatmul.mubr.bf16.gmra.mrb[0].mxu0 %v1079
        %v1256 = vpop.f32.mrb[0].mxu0
        %v1257 = vadd.f32 %v1105, %v1256
        %v1258 = vpop.f32.mrb[0].mxu0
        %v1259 = vadd.f32 %v1109, %v1258
        %v1260 = vpop.f32.mrb[0].mxu0
        %v1261 = vadd.f32 %v1105, %v1260
        %v1262 = vpop.f32.mrb[0].mxu0
        %v1263 = vadd.f32 %v1109, %v1262
        %1264 = vmatprep.mubr.bf16.mxu0 0
        %1265 = vmatmul.mubr.bf16.gmra.mrb[0].mxu0 %v1080
        %v1266 = vpop.f32.mrb[0].mxu0
        %v1267 = vadd.f32 %v1105, %v1266
        %v1268 = vpop.f32.mrb[0].mxu0
        %v1269 = vadd.f32 %v1109, %v1268
        %v1270 = vpop.f32.mrb[0].mxu0
        %v1271 = vadd.f32 %v1105, %v1270
        %v1272 = vpop.f32.mrb[0].mxu0
        %v1273 = vadd.f32 %v1109, %v1272
        %1274 = vmatprep.mubr.bf16.mxu0 0
        %1275 = vmatmul.mubr.bf16.gmra.mrb[0].mxu0 %v1081
        %v1276 = vpop.f32.mrb[0].mxu0
        %v1277 = vadd.f32 %v1105, %v1276
        %v1278 = vpop.f32.mrb[0].mxu0
        %v1279 = vadd.f32 %v1109, %v1278
        %v1280 = vpop.f32.mrb[0].mxu0
        %v1281 = vadd.f32 %v1105, %v1280
        %v1282 = vpop.f32.mrb[0].mxu0
        %v1283 = vadd.f32 %v1109, %v1282
        %1284 = vmatprep.mubr.bf16.mxu0 0
        %1285 = vmatmul.mubr.bf16.gmra.mrb[0].mxu0 %v1082
        %v1286 = vpop.f32.mrb[0].mxu0
        %v1287 = vadd.f32 %v1105, %v1286
        %v1288 = vpop.f32.mrb[0].mxu0
        %v1289 = vadd.f32 %v1109, %v1288
        %v1290 = vpop.f32.mrb[0].mxu0
        %v1291 = vadd.f32 %v1105, %v1290
        %v1292 = vpop.f32.mrb[0].mxu0
        %v1293 = vadd.f32 %v1109, %v1292
        %1294 = vmatprep.mubr.bf16.mxu0 0
        %1295 = vmatmul.mubr.bf16.gmra.mrb[0].mxu0 %v1083
        %v1296 = vpop.f32.mrb[0].mxu0
        %v1297 = vadd.f32 %v1105, %v1296
        %v1298 = vpop.f32.mrb[0].mxu0
        %v1299 = vadd.f32 %v1109, %v1298
        %v1300 = vpop.f32.mrb[0].mxu0
        %v1301 = vadd.f32 %v1105, %v1300
        %v1302 = vpop.f32.mrb[0].mxu0
        %v1303 = vadd.f32 %v1109, %v1302
        %1304 = vdwg.mxu0
        %1305 = vst [vmem:[%s375] sm:$0xff] %v1227
        %1306 = vst [vmem:[%s375 + $0x8] sm:$0xff] %v1229
        %1307 = vst [vmem:[%s375 + $0x10] sm:$0xff] %v1231
        %1308 = vst [vmem:[%s375 + $0x18] sm:$0xff] %v1233
        %1309 = vst [vmem:[%s375 + $0x20] sm:$0xff] %v1237
        %1310 = vst [vmem:[%s375 + $0x28] sm:$0xff] %v1239
        %1311 = vst [vmem:[%s375 + $0x30] sm:$0xff] %v1241
        %1312 = vst [vmem:[%s375 + $0x38] sm:$0xff] %v1243
        %1313 = vst [vmem:[%s375 + $0x40] sm:$0xff] %v1247
        %1314 = vst [vmem:[%s375 + $0x48] sm:$0xff] %v1249
        %1315 = vst [vmem:[%s375 + $0x50] sm:$0xff] %v1251
        %1316 = vst [vmem:[%s375 + $0x58] sm:$0xff] %v1253
        %1317 = vst [vmem:[%s375 + $0x60] sm:$0xff] %v1257
        %1318 = vst [vmem:[%s375 + $0x68] sm:$0xff] %v1259
        %1319 = vst [vmem:[%s375 + $0x70] sm:$0xff] %v1261
        %1320 = vst [vmem:[%s375 + $0x78] sm:$0xff] %v1263
        %1321 = vst [vmem:[%s375 + $0x80] sm:$0xff] %v1267
        %1322 = vst [vmem:[%s375 + $0x88] sm:$0xff] %v1269
        %1323 = vst [vmem:[%s375 + $0x90] sm:$0xff] %v1271
        %1324 = vst [vmem:[%s375 + $0x98] sm:$0xff] %v1273
        %1325 = vst [vmem:[%s375 + $0xa0] sm:$0xff] %v1277
        %1326 = vst [vmem:[%s375 + $0xa8] sm:$0xff] %v1279
        %1327 = vst [vmem:[%s375 + $0xb0] sm:$0xff] %v1281
        %1328 = vst [vmem:[%s375 + $0xb8] sm:$0xff] %v1283
        %1329 = vst [vmem:[%s375 + $0xc0] sm:$0xff] %v1287
        %1330 = vst [vmem:[%s375 + $0xc8] sm:$0xff] %v1289
        %1331 = vst [vmem:[%s375 + $0xd0] sm:$0xff] %v1291
        %1332 = vst [vmem:[%s375 + $0xd8] sm:$0xff] %v1293
        %1333 = vst [vmem:[%s375 + $0xe0] sm:$0xff] %v1297
        %1334 = vst [vmem:[%s375 + $0xe8] sm:$0xff] %v1299
        %1335 = vst [vmem:[%s375 + $0xf0] sm:$0xff] %v1301
        %1336 = vst [vmem:[%s375 + $0xf8] sm:$0xff] %v1303
        %1337 = vst [vmem:[%s382] sm:$0xff] %v902
        %1338 = vst [vmem:[%s382 + $0x8] sm:$0xff] %v906
        %1339 = vst [vmem:[%s382 + $0x10] sm:$0xff] %v912
        %1340 = vst [vmem:[%s382 + $0x18] sm:$0xff] %v916
        %1341 = vst [vmem:[%s382 + $0x20] sm:$0xff] %v922
        %1342 = vst [vmem:[%s382 + $0x28] sm:$0xff] %v926
        %1343 = vst [vmem:[%s382 + $0x30] sm:$0xff] %v932
        %1344 = vst [vmem:[%s382 + $0x38] sm:$0xff] %v936
        %1345 = vst [vmem:[%s382 + $0x40] sm:$0xff] %v942
        %1346 = vst [vmem:[%s382 + $0x48] sm:$0xff] %v946
        %1347 = vst [vmem:[%s382 + $0x50] sm:$0xff] %v952
        %1348 = vst [vmem:[%s382 + $0x58] sm:$0xff] %v956
        %1349 = vst [vmem:[%s382 + $0x60] sm:$0xff] %v962
        %1350 = vst [vmem:[%s382 + $0x68] sm:$0xff] %v966
        %1351 = vst [vmem:[%s382 + $0x70] sm:$0xff] %v972
        %1352 = vst [vmem:[%s382 + $0x78] sm:$0xff] %v976
        %1353 = vst [vmem:[%s389] sm:$0xff] %v904
        %1354 = vst [vmem:[%s389 + $0x8] sm:$0xff] %v908
        %1355 = vst [vmem:[%s389 + $0x10] sm:$0xff] %v914
        %1356 = vst [vmem:[%s389 + $0x18] sm:$0xff] %v918
        %1357 = vst [vmem:[%s389 + $0x20] sm:$0xff] %v924
        %1358 = vst [vmem:[%s389 + $0x28] sm:$0xff] %v928
        %1359 = vst [vmem:[%s389 + $0x30] sm:$0xff] %v934
        %1360 = vst [vmem:[%s389 + $0x38] sm:$0xff] %v938
        %1361 = vst [vmem:[%s389 + $0x40] sm:$0xff] %v944
        %1362 = vst [vmem:[%s389 + $0x48] sm:$0xff] %v948
        %1363 = vst [vmem:[%s389 + $0x50] sm:$0xff] %v954
        %1364 = vst [vmem:[%s389 + $0x58] sm:$0xff] %v958
        %1365 = vst [vmem:[%s389 + $0x60] sm:$0xff] %v964
        %1366 = vst [vmem:[%s389 + $0x68] sm:$0xff] %v968
        %1367 = vst [vmem:[%s389 + $0x70] sm:$0xff] %v974
        %1368 = vst [vmem:[%s389 + $0x78] sm:$0xff] %v978
        %s1369 = sand.u32 %s214, 1
        %s1370 = scalar_lea.sflag [#allocation3], %s1369
        %s1371 = sand.u32 %s214, 1
        %s1372 = smul.addr %s1371, 256
        %s1373 = scalar_lea.vmem [#allocation2], %s1372
        %s1374 = sand.u32 %s28, 1
        %s1375 = scalar_lea.sflag [#allocation5], %s1374
        %s1376 = sand.u32 %s240, 1
        %s1377 = smul.addr %s1376, 128
        %s1378 = scalar_lea.vmem [#allocation4], %s1377
        %s1379 = sand.u32 %s28, 1
        %s1380 = scalar_lea.sflag [#allocation5], %s1379
        %s1381 = sand.u32 %s266, 1
        %s1382 = smul.addr %s1381, 128
        %s1383 = scalar_lea.vmem [#allocation6], %s1382
        // Predicated region
        $region53: #{vae_forward.1} parent=51 // pred_check
          %p1384 = pneg %p224
        $region54: #{vae_forward.1} parent=51 // pred_check_branch
          %1386 = sbr.rel (%p1384) target = $region56
        $region55: #{vae_forward.1} parent=51 // pred_region
          %s1387 = smul.u32 16, %s28
          %s1389 = ssub.s32 4096, 4096
          %1390 = vsyncadd %s1370, %s1389
          %s1391 = smul.addr %s1387, 2
          %s1392 = smul.addr %s1391, 128
          %s1393 = scalar_lea.hbm %s8, %s1392
          %s1394 = sshll.u32 %s1373, 4
          %s1395 = int_to_ptr.vmem [resolvable:$true] %s1394
          %1400 = dma.vmem_to_hbm [thread:$0]  %s1395, 4096, %s1393, %s1370, 256, 256, 16
        $region56: #{vae_forward.1} parent=51 // pred_fallthru
          _
        // Predicated region
        $region57: #{vae_forward.1} parent=51 // pred_check
          %p1401 = pneg %p250
        $region58: #{vae_forward.1} parent=51 // pred_check_branch
          %1403 = sbr.rel (%p1401) target = $region60
        $region59: #{vae_forward.1} parent=51 // pred_region
          %s1404 = smul.u32 16, %s28
          %s1406 = ssub.s32 2048, 2048
          %1407 = vsyncadd %s1375, %s1406
          %s1408 = smul.addr %s1404, 128
          %s1409 = scalar_lea.hbm %s9, %s1408
          %s1410 = sshll.u32 %s1378, 4
          %s1411 = int_to_ptr.vmem [resolvable:$true] %s1410
          %1416 = dma.vmem_to_hbm [thread:$0]  %s1411, 2048, %s1409, %s1375, 128, 128, 8
        $region60: #{vae_forward.1} parent=51 // pred_fallthru
          _
        // Predicated region
        $region61: #{vae_forward.1} parent=51 // pred_check
          %p1417 = pneg %p276
        $region62: #{vae_forward.1} parent=51 // pred_check_branch
          %1419 = sbr.rel (%p1417) target = $region64
        $region63: #{vae_forward.1} parent=51 // pred_region
          %s1420 = smul.u32 16, %s28
          %s1422 = ssub.s32 2048, 2048
          %1423 = vsyncadd %s1380, %s1422
          %s1424 = smul.addr %s1420, 128
          %s1425 = scalar_lea.hbm %s10, %s1424
          %s1426 = sshll.u32 %s1383, 4
          %s1427 = int_to_ptr.vmem [resolvable:$true] %s1426
          %1432 = dma.vmem_to_hbm [thread:$0]  %s1427, 2048, %s1425, %s1380, 128, 128, 8
        $region64: #{vae_forward.1} parent=51 // pred_fallthru
          _
      $region52: #{vae_forward.1} parent=5 // pred_fallthru
        _
      %p1433 = scmp.le.s32.totalorder 2, %s23
      // Predicated region
      $region65: #{vae_forward.1} parent=5 // pred_check
        %p1434 = pneg %p1433
      $region66: #{vae_forward.1} parent=5 // pred_check_branch
        %1436 = sbr.rel (%p1434) target = $region68
      $region67: #{vae_forward.1} parent=5 // pred_region
        %s1437 = ssub.s32 %s23, 2
        // Predicated region
        $region69: #{vae_forward.1} parent=67 // pred_check
          %p1438 = pneg %p230
        $region70: #{vae_forward.1} parent=67 // pred_check_branch
          %1440 = sbr.rel (%p1438) target = $region72
        $region71: #{vae_forward.1} parent=67 // pred_region
          %s1441 = sand.u32 %s215, 1
          %s1442 = scalar_lea.sflag [#allocation3], %s1441
          %s1443 = sand.u32 %s215, 1
          %s1444 = smul.addr %s1443, 256
          %s1445 = scalar_lea.vmem [#allocation2], %s1444
          %1446 = dma.done %s1442, 4096
        $region72: #{vae_forward.1} parent=67 // pred_fallthru
          _
        // Predicated region
        $region73: #{vae_forward.1} parent=67 // pred_check
          %p1447 = pneg %p256
        $region74: #{vae_forward.1} parent=67 // pred_check_branch
          %1449 = sbr.rel (%p1447) target = $region76
        $region75: #{vae_forward.1} parent=67 // pred_region
          %s1450 = sand.u32 %s29, 1
          %s1451 = scalar_lea.sflag [#allocation5], %s1450
          %s1452 = sand.u32 %s241, 1
          %s1453 = smul.addr %s1452, 128
          %s1454 = scalar_lea.vmem [#allocation4], %s1453
          %1455 = dma.done %s1451, 2048
        $region76: #{vae_forward.1} parent=67 // pred_fallthru
          _
        // Predicated region
        $region77: #{vae_forward.1} parent=67 // pred_check
          %p1456 = pneg %p282
        $region78: #{vae_forward.1} parent=67 // pred_check_branch
          %1458 = sbr.rel (%p1456) target = $region80
        $region79: #{vae_forward.1} parent=67 // pred_region
          %s1459 = sand.u32 %s29, 1
          %s1460 = scalar_lea.sflag [#allocation5], %s1459
          %s1461 = sand.u32 %s267, 1
          %s1462 = smul.addr %s1461, 128
          %s1463 = scalar_lea.vmem [#allocation6], %s1462
          %1464 = dma.done %s1460, 2048
        $region80: #{vae_forward.1} parent=67 // pred_fallthru
          _
      $region68: #{vae_forward.1} parent=5 // pred_fallthru
        _
    $region6: #{vae_forward.1} parent=1 // loop_footer
      %s27 = sadd.s32 1, %s23
    $region7: #{vae_forward.1} parent=1 // loop_footer_branch
      %22 = sbr.rel target = $region3
    $region8: #{vae_forward.1} parent=1 // loop_exit
      _
    %1465 = vsyncpa [#allocation3], 1
    %s1466 = scalar_lea.sflag [#allocation3], 1
    %1467 = vsyncpa %s1466, 1
    %1468 = vsyncpa [#allocation5], 1
    %s1469 = scalar_lea.sflag [#allocation5], 1
    %1470 = vsyncpa %s1469, 1

</llo_original>
